<compile_context>
chip_gen: v5e
topology: v5e:2x2
jax: 0.10.0
libtpu: 0.0.40
codegen_flags: <defaults>
</compile_context>

<pallas_src>
import functools

import jax
import jax.numpy as jnp
from jax.experimental import pallas as pl
from jax.experimental.pallas import tpu as pltpu

# ----------------------------- model config ---------------------------------
BATCH = 2
T_STEPS = 4
C_IN = 4
H = W = 16
CHANNELS = (8, 8)        # two LIF conv layers (3x3, stride 1, pad 1)
N_OUT = 10               # readout classes
LC_AMPL = 0.5            # mirrors reset_lc_parameters

BH = BATCH * H           # sublane (row) extent of the lane-dense layout
LANE_IN = W * C_IN       # 64
LANE0 = W * CHANNELS[0]  # 128
LANE1 = W * CHANNELS[1]  # 128

# LIF constants (DECOLLE defaults style)
ALPHA, BETA = 0.9, 0.85
TAU_M, TAU_S = 1.0 / (1.0 - ALPHA), 1.0 / (1.0 - BETA)
ALPHARP, WRP = 0.65, 1.0


# ----------------------------- fused sequence kernel -------------------------
def _fused_seq_kernel(
    n_steps,
    # inputs
    x_ref,                                   # (T, BH, W*C_IN)
    q0_ref, p0_ref, r0_ref, s0_ref,          # initial states, layer 0
    q1_ref, p1_ref, r1_ref, s1_ref,          # initial states, layer 1
    shift_ref,                               # (2, BH, BH): [row-shift-down, row-shift-up]
    bw0_ref, b0_ref,                         # (3, W*C_IN, W*c0), (1, W*c0)
    bw1_ref, b1_ref,                         # (3, W*c0,  W*c1), (1, W*c1)
    # outputs
    u_seq0, u_seq1,                          # (T, BH, W*c) membrane per step
    q0_out, p0_out, r0_out, s0_out,          # final states, layer 0
    q1_out, p1_out, r1_out, s1_out,          # final states, layer 1
):
    f32 = jnp.float32
    sdn = shift_ref[0]          # (Sdn @ P)[b, h] = P[b, h-1], zero at h = 0
    sup = shift_ref[1]          # (Sup @ P)[b, h] = P[b, h+1], zero at h = H-1
    bw0_dn, bw0_id, bw0_up = bw0_ref[0], bw0_ref[1], bw0_ref[2]
    bw1_dn, bw1_id, bw1_up = bw1_ref[0], bw1_ref[1], bw1_ref[2]
    b0 = b0_ref[...]
    b1 = b1_ref[...]

    # states live as values (vregs / VMEM) across the whole sequence
    q0, p0, r0, s0 = q0_ref[...], p0_ref[...], r0_ref[...], s0_ref[...]
    q1, p1, r1, s1 = q1_ref[...], p1_ref[...], r1_ref[...], s1_ref[...]

    def lif_step(sin, q, p, r, s, bw_dn, bw_id, bw_up, bias):
        # LIF traces.  NOTE: P update uses the OLD Q (DECOLLE ordering).
        q_new = BETA * q + TAU_S * sin
        p_new = ALPHA * p + TAU_M * q
        # 3x3 / pad-1 conv of P, all on the MXU:
        #   row shifts (block-diagonal per image, zero at borders) followed by
        #   three band matmuls (W-shift + channel mixing folded into weights).
        p_dn = jnp.dot(sdn, p_new, preferred_element_type=f32)   # P[h-1]
        p_up = jnp.dot(sup, p_new, preferred_element_type=f32)   # P[h+1]
        u_conv = (jnp.dot(p_dn, bw_dn, preferred_element_type=f32)
                  + jnp.dot(p_new, bw_id, preferred_element_type=f32)
                  + jnp.dot(p_up, bw_up, preferred_element_type=f32))
        # Refractory update, membrane potential, threshold spike.
        r_new = ALPHARP * r - WRP * s
        u = u_conv + bias + r_new
        s_new = (u > 0.0).astype(f32)
        return q_new, p_new, r_new, s_new, u

    for t in range(n_steps):                 # short, static -> fully unrolled
        x = x_ref[t]
        q0, p0, r0, s0, u0 = lif_step(x, q0, p0, r0, s0,
                                      bw0_dn, bw0_id, bw0_up, b0)
        u_seq0[t] = u0
        q1, p1, r1, s1, u1 = lif_step(s0, q1, p1, r1, s1,
                                      bw1_dn, bw1_id, bw1_up, b1)
        u_seq1[t] = u1

    q0_out[...] = q0
    p0_out[...] = p0
    r0_out[...] = r0
    s0_out[...] = s0
    q1_out[...] = q1
    p1_out[...] = p1
    r1_out[...] = r1
    s1_out[...] = s1


def _readout_kernel(u0_ref, u1_ref, w0_ref, b0_ref, w1_ref, b1_ref,
                    r0_ref, r1_ref):
    # readout: flatten(sigmoid(U)) @ W_ro + b_ro for BOTH layers in one launch
    f32 = jnp.float32
    r0_ref[...] = (jnp.dot(jax.nn.sigmoid(u0_ref[...]), w0_ref[...],
                           preferred_element_type=f32) + b0_ref[...])
    r1_ref[...] = (jnp.dot(jax.nn.sigmoid(u1_ref[...]), w1_ref[...],
                           preferred_element_type=f32) + b1_ref[...])


# ----------------------------- kernel wrappers --------------------------------
_VMEM = pl.BlockSpec(memory_space=pltpu.MemorySpace.VMEM)


def decolle_seq_forward(params, states, x_seq):
    """Fused DECOLLE forward over a (T, BATCH*H, W*C_IN) lane-dense spike
    sequence.  Returns per-timestep membrane sequences per layer and the final
    LIF states.  One pallas_call for the whole sequence; states stay in VMEM."""
    n_steps = x_seq.shape[0]
    (q0, p0, r0, s0), (q1, p1, r1, s1) = states
    f32 = jnp.float32

    out_shape = (
        jax.ShapeDtypeStruct((n_steps, BH, LANE0), f32),   # u_seq0
        jax.ShapeDtypeStruct((n_steps, BH, LANE1), f32),   # u_seq1
        jax.ShapeDtypeStruct((BH, LANE_IN), f32),          # q0
        jax.ShapeDtypeStruct((BH, LANE_IN), f32),          # p0
        jax.ShapeDtypeStruct((BH, LANE0), f32),            # r0
        jax.ShapeDtypeStruct((BH, LANE0), f32),            # s0
        jax.ShapeDtypeStruct((BH, LANE0), f32),            # q1
        jax.ShapeDtypeStruct((BH, LANE0), f32),            # p1
        jax.ShapeDtypeStruct((BH, LANE1), f32),            # r1
        jax.ShapeDtypeStruct((BH, LANE1), f32),            # s1
    )
    outs = pl.pallas_call(
        functools.partial(_fused_seq_kernel, n_steps),
        out_shape=out_shape,
        in_specs=[_VMEM] * 14,
        out_specs=tuple([_VMEM] * len(out_shape)),
    )(x_seq, q0, p0, r0, s0, q1, p1, r1, s1,
      params["shift"],
      params["lif"][0]["bw"], params["lif"][0]["b_lane"],
      params["lif"][1]["bw"], params["lif"][1]["b_lane"])

    u_seq0, u_seq1 = outs[0], outs[1]
    new_states = ((outs[2], outs[3], outs[4], outs[5]),
                  (outs[6], outs[7], outs[8], outs[9]))
    return (u_seq0, u_seq1), new_states


def linear_readouts(u0_flat, u1_flat, ro0, ro1):
    m = u0_flat.shape[0]
    return pl.pallas_call(
        _readout_kernel,
        out_shape=(jax.ShapeDtypeStruct((m, N_OUT), jnp.float32),
                   jax.ShapeDtypeStruct((m, N_OUT), jnp.float32)),
        in_specs=[_VMEM] * 6,
        out_specs=(_VMEM, _VMEM),
    )(u0_flat, u1_flat,
      ro0["w"], ro0["b"].reshape(1, N_OUT),
      ro1["w"], ro1["b"].reshape(1, N_OUT))


# ----------------------------- params / states / boundary ---------------------
def _conv_band_mats(w):
    """w: (c_out, c_in, 3, 3) PyTorch Conv2d weights (cross-correlation).
    Returns (3, W*c_in, W*c_out) band matrices: bw[kh][w*ci + ci, w'*co + co]
    = w[co, ci, kh, w - w' + 1] (zero outside the 3-wide band / image border)."""
    wk = jnp.transpose(w, (2, 3, 1, 0))            # (kh, kw, ci, co)
    mats = []
    for kh in range(3):
        c_in, c_out = wk.shape[2], wk.shape[3]
        m = jnp.zeros((W * c_in, W * c_out), jnp.float32)
        for kw in range(3):
            shift = jnp.eye(W, k=1 - kw, dtype=jnp.float32)   # [w, w+1-kw] = 1
            m = m + jnp.kron(shift, wk[kh, kw])
        mats.append(m)
    return jnp.stack(mats)


def _row_shift_mats():
    """(2, BH, BH): block-diagonal (per image) H-shift matrices.
    shift[0] @ P -> P[h-1] (zero at h=0); shift[1] @ P -> P[h+1] (zero at H-1)."""
    eye_b = jnp.eye(BATCH, dtype=jnp.float32)
    sdn = jnp.kron(eye_b, jnp.eye(H, k=-1, dtype=jnp.float32))
    sup = jnp.kron(eye_b, jnp.eye(H, k=1, dtype=jnp.float32))
    return jnp.stack([sdn, sup])


def init_params(key):
    keys = jax.random.split(key, 4 * len(CHANNELS))
    params = {"lif": [], "readout": [], "shift": _row_shift_mats()}
    c_prev = C_IN
    for i, c_out in enumerate(CHANNELS):
        fan_in = c_prev * 3 * 3
        wb = 1.0 / (fan_in ** 0.5)
        w = jax.random.uniform(keys[2 * i], (c_out, c_prev, 3, 3),
                               minval=-wb, maxval=wb, dtype=jnp.float32)
        b = jax.random.uniform(keys[2 * i + 1], (c_out,),
                               minval=-wb, maxval=wb, dtype=jnp.float32)
        params["lif"].append({
            "w": w, "b": b,
            "bw": _conv_band_mats(w),                          # conv as matmuls
            "b_lane": jnp.tile(b, W).reshape(1, W * c_out),    # lane-dense bias
        })
        # readout init mirrors reset_lc_parameters: U(-stdv, stdv),
        # stdv = lc_ampl / sqrt(fan_in)
        ro_in = c_out * H * W
        stdv = LC_AMPL / (ro_in ** 0.5)
        wro = jax.random.uniform(keys[2 * len(CHANNELS) + 2 * i], (ro_in, N_OUT),
                                 minval=-stdv, maxval=stdv, dtype=jnp.float32)
        bro = jax.random.uniform(keys[2 * len(CHANNELS) + 2 * i + 1], (N_OUT,),
                                 minval=-stdv, maxval=stdv, dtype=jnp.float32)
        params["readout"].append({"w": wro, "b": bro})
        c_prev = c_out
    return params


def zero_states():
    z = lambda lane: jnp.zeros((BH, lane), jnp.float32)
    return ((z(LANE_IN), z(LANE_IN), z(LANE0), z(LANE0)),
            (z(LANE0), z(LANE0), z(LANE1), z(LANE1)))


def _to_lane_dense_seq(x_btchw):
    # (B, T, C, H, W) -> (T, B*H, W*C); done once at the model boundary.
    t = x_btchw.shape[1]
    return jnp.transpose(x_btchw, (1, 0, 3, 4, 2)).reshape(t, BH, W * C_IN)


def _from_lane_dense(u, c):
    # (B*H, W*c) -> (B, c, H, W)
    return jnp.transpose(u.reshape(BATCH, H, W, c), (0, 3, 1, 2))


@jax.jit
def forward_step(params, states, x_nchw):
    """One DECOLLE forward step on a (B, C, H, W) frame.
    Returns (s_out, r_out, u_out) per layer (NCHW / (B, N_OUT)) and the new
    LIF states.  Two kernel launches total (sequence + fused dual readout)."""
    xt = jnp.transpose(x_nchw, (0, 2, 3, 1)).reshape(1, BH, W * C_IN)
    (u_seq0, u_seq1), new_states = decolle_seq_forward(params, states, xt)

    u0, u1 = u_seq0[0], u_seq1[0]
    # spikes recomputed outside the kernel (trivial VPU/XLA op)
    s_out = [_from_lane_dense((u0 > 0.0).astype(jnp.float32), CHANNELS[0]),
             _from_lane_dense((u1 > 0.0).astype(jnp.float32), CHANNELS[1])]
    u_out = [_from_lane_dense(u0, CHANNELS[0]),
             _from_lane_dense(u1, CHANNELS[1])]

    # (T, B*H, W*c) -> (T*B, H*W*c) is a contiguous (free) reshape
    u0_flat = u_seq0.reshape(BATCH, H * W * CHANNELS[0])
    u1_flat = u_seq1.reshape(BATCH, H * W * CHANNELS[1])
    r0, r1 = linear_readouts(u0_flat, u1_flat,
                             params["readout"][0], params["readout"][1])
    return (s_out, [r0, r1], u_out), new_states


@jax.jit
def _burnin_impl(params, x_bt):
    x_seq = _to_lane_dense_seq(x_bt)
    _, new_states = decolle_seq_forward(params, zero_states(), x_seq)
    return new_states


def decolle_init(params, data_batch, burnin):
    """Mirrors DECOLLEBase.init: reset the LIF states, then run
    max(len(self), burnin) forward steps over the time axis.  The whole burn-in
    is one fused kernel call; its outputs are discarded (as in the original)."""
    n_steps = max(len(CHANNELS), burnin)
    return _burnin_impl(params, data_batch[:, :n_steps])


# ----------------------------- main -------------------------------------------
if __name__ == "__main__":
    key = jax.random.PRNGKey(0)
    kp, kx = jax.random.split(key)
    params = init_params(kp)

    # synthetic spike input, PyTorch convention (B, T, C, H, W)
    x = (jax.random.uniform(kx, (BATCH, T_STEPS, C_IN, H, W)) < 0.3).astype(jnp.float32)

    states = decolle_init(params, x, burnin=3)
    (s_out, r_out, u_out), states = forward_step(params, states, x[:, -1])

    jax.block_until_ready(r_out)
    assert len(s_out) == len(CHANNELS)
    assert r_out[0].shape == (BATCH, N_OUT) and r_out[1].shape == (BATCH, N_OUT)
    assert s_out[0].shape == (BATCH, CHANNELS[0], H, W)
    assert u_out[1].shape == (BATCH, CHANNELS[1], H, W)
    assert bool(jnp.all(jnp.isfinite(r_out[0]))) and bool(jnp.all(jnp.isfinite(r_out[1])))
    print("KERNEL_OK")
</pallas_src>

<mosaic_0001>
module attributes {stable_mosaic.version = 11 : i64} {
  func.func @_fused_seq_kernel(%arg0: memref<3x32x64xf32, #tpu.memory_space<vmem>>, %arg1: memref<32x64xf32, #tpu.memory_space<vmem>>, %arg2: memref<32x64xf32, #tpu.memory_space<vmem>>, %arg3: memref<32x128xf32, #tpu.memory_space<vmem>>, %arg4: memref<32x128xf32, #tpu.memory_space<vmem>>, %arg5: memref<32x128xf32, #tpu.memory_space<vmem>>, %arg6: memref<32x128xf32, #tpu.memory_space<vmem>>, %arg7: memref<32x128xf32, #tpu.memory_space<vmem>>, %arg8: memref<32x128xf32, #tpu.memory_space<vmem>>, %arg9: memref<2x32x32xf32, #tpu.memory_space<vmem>>, %arg10: memref<3x64x128xf32, #tpu.memory_space<vmem>>, %arg11: memref<1x128xf32, #tpu.memory_space<vmem>>, %arg12: memref<3x128x128xf32, #tpu.memory_space<vmem>>, %arg13: memref<1x128xf32, #tpu.memory_space<vmem>>, %arg14: memref<3x32x128xf32, #tpu.memory_space<vmem>>, %arg15: memref<3x32x128xf32, #tpu.memory_space<vmem>>, %arg16: memref<32x64xf32, #tpu.memory_space<vmem>>, %arg17: memref<32x64xf32, #tpu.memory_space<vmem>>, %arg18: memref<32x128xf32, #tpu.memory_space<vmem>>, %arg19: memref<32x128xf32, #tpu.memory_space<vmem>>, %arg20: memref<32x128xf32, #tpu.memory_space<vmem>>, %arg21: memref<32x128xf32, #tpu.memory_space<vmem>>, %arg22: memref<32x128xf32, #tpu.memory_space<vmem>>, %arg23: memref<32x128xf32, #tpu.memory_space<vmem>>) attributes {dimension_semantics = [], scalar_prefetch = 0 : i64, scratch_operands = 0 : i64, tpu.core_type = #tpu.core_type<tc>} {
    %c0 = arith.constant 0 : index
    %c0_0 = arith.constant 0 : index
    %c0_1 = arith.constant 0 : index
    %0 = vector.load %arg9[%c0, %c0_0, %c0_1] : memref<2x32x32xf32, #tpu.memory_space<vmem>>, vector<1x32x32xf32>
    %1 = vector.shape_cast %0 : vector<1x32x32xf32> to vector<32x32xf32>
    %c1 = arith.constant 1 : index
    %c0_2 = arith.constant 0 : index
    %c0_3 = arith.constant 0 : index
    %2 = vector.load %arg9[%c1, %c0_2, %c0_3] : memref<2x32x32xf32, #tpu.memory_space<vmem>>, vector<1x32x32xf32>
    %3 = vector.shape_cast %2 : vector<1x32x32xf32> to vector<32x32xf32>
    %c0_4 = arith.constant 0 : index
    %c0_5 = arith.constant 0 : index
    %c0_6 = arith.constant 0 : index
    %4 = vector.load %arg10[%c0_4, %c0_5, %c0_6] : memref<3x64x128xf32, #tpu.memory_space<vmem>>, vector<1x64x128xf32>
    %5 = vector.shape_cast %4 : vector<1x64x128xf32> to vector<64x128xf32>
    %c1_7 = arith.constant 1 : index
    %c0_8 = arith.constant 0 : index
    %c0_9 = arith.constant 0 : index
    %6 = vector.load %arg10[%c1_7, %c0_8, %c0_9] : memref<3x64x128xf32, #tpu.memory_space<vmem>>, vector<1x64x128xf32>
    %7 = vector.shape_cast %6 : vector<1x64x128xf32> to vector<64x128xf32>
    %c2 = arith.constant 2 : index
    %c0_10 = arith.constant 0 : index
    %c0_11 = arith.constant 0 : index
    %8 = vector.load %arg10[%c2, %c0_10, %c0_11] : memref<3x64x128xf32, #tpu.memory_space<vmem>>, vector<1x64x128xf32>
    %9 = vector.shape_cast %8 : vector<1x64x128xf32> to vector<64x128xf32>
    %c0_12 = arith.constant 0 : index
    %c0_13 = arith.constant 0 : index
    %c0_14 = arith.constant 0 : index
    %10 = vector.load %arg12[%c0_12, %c0_13, %c0_14] : memref<3x128x128xf32, #tpu.memory_space<vmem>>, vector<1x128x128xf32>
    %11 = vector.shape_cast %10 : vector<1x128x128xf32> to vector<128x128xf32>
    %c1_15 = arith.constant 1 : index
    %c0_16 = arith.constant 0 : index
    %c0_17 = arith.constant 0 : index
    %12 = vector.load %arg12[%c1_15, %c0_16, %c0_17] : memref<3x128x128xf32, #tpu.memory_space<vmem>>, vector<1x128x128xf32>
    %13 = vector.shape_cast %12 : vector<1x128x128xf32> to vector<128x128xf32>
    %c2_18 = arith.constant 2 : index
    %c0_19 = arith.constant 0 : index
    %c0_20 = arith.constant 0 : index
    %14 = vector.load %arg12[%c2_18, %c0_19, %c0_20] : memref<3x128x128xf32, #tpu.memory_space<vmem>>, vector<1x128x128xf32>
    %15 = vector.shape_cast %14 : vector<1x128x128xf32> to vector<128x128xf32>
    %c0_21 = arith.constant 0 : index
    %c0_22 = arith.constant 0 : index
    %16 = vector.load %arg11[%c0_21, %c0_22] : memref<1x128xf32, #tpu.memory_space<vmem>>, vector<1x128xf32>
    %c0_23 = arith.constant 0 : index
    %c0_24 = arith.constant 0 : index
    %17 = vector.load %arg13[%c0_23, %c0_24] : memref<1x128xf32, #tpu.memory_space<vmem>>, vector<1x128xf32>
    %c0_25 = arith.constant 0 : index
    %c0_26 = arith.constant 0 : index
    %18 = vector.load %arg1[%c0_25, %c0_26] : memref<32x64xf32, #tpu.memory_space<vmem>>, vector<32x64xf32>
    %c0_27 = arith.constant 0 : index
    %c0_28 = arith.constant 0 : index
    %19 = vector.load %arg2[%c0_27, %c0_28] : memref<32x64xf32, #tpu.memory_space<vmem>>, vector<32x64xf32>
    %c0_29 = arith.constant 0 : index
    %c0_30 = arith.constant 0 : index
    %20 = vector.load %arg3[%c0_29, %c0_30] : memref<32x128xf32, #tpu.memory_space<vmem>>, vector<32x128xf32>
    %c0_31 = arith.constant 0 : index
    %c0_32 = arith.constant 0 : index
    %21 = vector.load %arg4[%c0_31, %c0_32] : memref<32x128xf32, #tpu.memory_space<vmem>>, vector<32x128xf32>
    %c0_33 = arith.constant 0 : index
    %c0_34 = arith.constant 0 : index
    %22 = vector.load %arg5[%c0_33, %c0_34] : memref<32x128xf32, #tpu.memory_space<vmem>>, vector<32x128xf32>
    %c0_35 = arith.constant 0 : index
    %c0_36 = arith.constant 0 : index
    %23 = vector.load %arg6[%c0_35, %c0_36] : memref<32x128xf32, #tpu.memory_space<vmem>>, vector<32x128xf32>
    %c0_37 = arith.constant 0 : index
    %c0_38 = arith.constant 0 : index
    %24 = vector.load %arg7[%c0_37, %c0_38] : memref<32x128xf32, #tpu.memory_space<vmem>>, vector<32x128xf32>
    %c0_39 = arith.constant 0 : index
    %c0_40 = arith.constant 0 : index
    %25 = vector.load %arg8[%c0_39, %c0_40] : memref<32x128xf32, #tpu.memory_space<vmem>>, vector<32x128xf32>
    %c0_41 = arith.constant 0 : index
    %c0_42 = arith.constant 0 : index
    %c0_43 = arith.constant 0 : index
    %26 = vector.load %arg0[%c0_41, %c0_42, %c0_43] : memref<3x32x64xf32, #tpu.memory_space<vmem>>, vector<1x32x64xf32>
    %27 = vector.shape_cast %26 : vector<1x32x64xf32> to vector<32x64xf32>
    %cst = arith.constant 8.500000e-01 : f32
    %28 = vector.broadcast %cst : f32 to vector<32x64xf32>
    %29 = arith.mulf %28, %18 : vector<32x64xf32>
    %cst_44 = arith.constant 6.66666651 : f32
    %30 = vector.broadcast %cst_44 : f32 to vector<32x64xf32>
    %31 = arith.mulf %30, %27 : vector<32x64xf32>
    %32 = arith.addf %29, %31 : vector<32x64xf32>
    %cst_45 = arith.constant 0.899999976 : f32
    %33 = vector.broadcast %cst_45 : f32 to vector<32x64xf32>
    %34 = arith.mulf %33, %19 : vector<32x64xf32>
    %cst_46 = arith.constant 1.000000e+01 : f32
    %35 = vector.broadcast %cst_46 : f32 to vector<32x64xf32>
    %36 = arith.mulf %35, %18 : vector<32x64xf32>
    %37 = arith.addf %34, %36 : vector<32x64xf32>
    %cst_47 = arith.constant dense<0.000000e+00> : vector<32x64xf32>
    %38 = tpu.matmul %1, %37, %cst_47 {dimension_numbers = #tpu.dot_dimension_numbers<[1], [0], [0], [1], [0, 0, 1, 1], [], []>} : vector<32x32xf32>, vector<32x64xf32>, vector<32x64xf32> -> vector<32x64xf32>
    %cst_48 = arith.constant dense<0.000000e+00> : vector<32x64xf32>
    %39 = tpu.matmul %3, %37, %cst_48 {dimension_numbers = #tpu.dot_dimension_numbers<[1], [0], [0], [1], [0, 0, 1, 1], [], []>} : vector<32x32xf32>, vector<32x64xf32>, vector<32x64xf32> -> vector<32x64xf32>
    %cst_49 = arith.constant dense<0.000000e+00> : vector<32x128xf32>
    %40 = tpu.matmul %38, %5, %cst_49 {dimension_numbers = #tpu.dot_dimension_numbers<[1], [0], [0], [1], [0, 0, 1, 1], [], []>} : vector<32x64xf32>, vector<64x128xf32>, vector<32x128xf32> -> vector<32x128xf32>
    %cst_50 = arith.constant dense<0.000000e+00> : vector<32x128xf32>
    %41 = tpu.matmul %37, %7, %cst_50 {dimension_numbers = #tpu.dot_dimension_numbers<[1], [0], [0], [1], [0, 0, 1, 1], [], []>} : vector<32x64xf32>, vector<64x128xf32>, vector<32x128xf32> -> vector<32x128xf32>
    %42 = arith.addf %40, %41 : vector<32x128xf32>
    %cst_51 = arith.constant dense<0.000000e+00> : vector<32x128xf32>
    %43 = tpu.matmul %39, %9, %cst_51 {dimension_numbers = #tpu.dot_dimension_numbers<[1], [0], [0], [1], [0, 0, 1, 1], [], []>} : vector<32x64xf32>, vector<64x128xf32>, vector<32x128xf32> -> vector<32x128xf32>
    %44 = arith.addf %42, %43 : vector<32x128xf32>
    %cst_52 = arith.constant 6.500000e-01 : f32
    %45 = vector.broadcast %cst_52 : f32 to vector<32x128xf32>
    %46 = arith.mulf %45, %20 : vector<32x128xf32>
    %cst_53 = arith.constant 1.000000e+00 : f32
    %47 = vector.broadcast %cst_53 : f32 to vector<32x128xf32>
    %48 = arith.mulf %47, %21 : vector<32x128xf32>
    %49 = arith.subf %46, %48 : vector<32x128xf32>
    %50 = vector.broadcast %16 : vector<1x128xf32> to vector<32x128xf32>
    %51 = arith.addf %44, %50 : vector<32x128xf32>
    %52 = arith.addf %51, %49 : vector<32x128xf32>
    %cst_54 = arith.constant 0.000000e+00 : f32
    %53 = vector.broadcast %cst_54 : f32 to vector<32x128xf32>
    %54 = arith.cmpf ogt, %52, %53 : vector<32x128xf32>
    %55 = arith.extui %54 : vector<32x128xi1> to vector<32x128xi32>
    %56 = arith.sitofp %55 : vector<32x128xi32> to vector<32x128xf32>
    %c0_55 = arith.constant 0 : index
    %c0_56 = arith.constant 0 : index
    %c0_57 = arith.constant 0 : index
    %57 = vector.load %arg14[%c0_55, %c0_56, %c0_57] : memref<3x32x128xf32, #tpu.memory_space<vmem>>, vector<1x32x128xf32>
    %58 = vector.shape_cast %57 : vector<1x32x128xf32> to vector<32x128xf32>
    %59 = vector.shape_cast %52 : vector<32x128xf32> to vector<1x32x128xf32>
    tpu.vector_store %arg14[%c0_55, %c0_56, %c0_57], %59 {strides = array<i32>} : memref<3x32x128xf32, #tpu.memory_space<vmem>>, vector<1x32x128xf32>,
    %cst_58 = arith.constant 8.500000e-01 : f32
    %60 = vector.broadcast %cst_58 : f32 to vector<32x128xf32>
    %61 = arith.mulf %60, %22 : vector<32x128xf32>
    %cst_59 = arith.constant 6.66666651 : f32
    %62 = vector.broadcast %cst_59 : f32 to vector<32x128xf32>
    %63 = arith.mulf %62, %56 : vector<32x128xf32>
    %64 = arith.addf %61, %63 : vector<32x128xf32>
    %cst_60 = arith.constant 0.899999976 : f32
    %65 = vector.broadcast %cst_60 : f32 to vector<32x128xf32>
    %66 = arith.mulf %65, %23 : vector<32x128xf32>
    %cst_61 = arith.constant 1.000000e+01 : f32
    %67 = vector.broadcast %cst_61 : f32 to vector<32x128xf32>
    %68 = arith.mulf %67, %22 : vector<32x128xf32>
    %69 = arith.addf %66, %68 : vector<32x128xf32>
    %cst_62 = arith.constant dense<0.000000e+00> : vector<32x128xf32>
    %70 = tpu.matmul %1, %69, %cst_62 {dimension_numbers = #tpu.dot_dimension_numbers<[1], [0], [0], [1], [0, 0, 1, 1], [], []>} : vector<32x32xf32>, vector<32x128xf32>, vector<32x128xf32> -> vector<32x128xf32>
    %cst_63 = arith.constant dense<0.000000e+00> : vector<32x128xf32>
    %71 = tpu.matmul %3, %69, %cst_63 {dimension_numbers = #tpu.dot_dimension_numbers<[1], [0], [0], [1], [0, 0, 1, 1], [], []>} : vector<32x32xf32>, vector<32x128xf32>, vector<32x128xf32> -> vector<32x128xf32>
    %cst_64 = arith.constant dense<0.000000e+00> : vector<32x128xf32>
    %72 = tpu.matmul %70, %11, %cst_64 {dimension_numbers = #tpu.dot_dimension_numbers<[1], [0], [0], [1], [0, 0, 1, 1], [], []>} : vector<32x128xf32>, vector<128x128xf32>, vector<32x128xf32> -> vector<32x128xf32>
    %cst_65 = arith.constant dense<0.000000e+00> : vector<32x128xf32>
    %73 = tpu.matmul %69, %13, %cst_65 {dimension_numbers = #tpu.dot_dimension_numbers<[1], [0], [0], [1], [0, 0, 1, 1], [], []>} : vector<32x128xf32>, vector<128x128xf32>, vector<32x128xf32> -> vector<32x128xf32>
    %74 = arith.addf %72, %73 : vector<32x128xf32>
    %cst_66 = arith.constant dense<0.000000e+00> : vector<32x128xf32>
    %75 = tpu.matmul %71, %15, %cst_66 {dimension_numbers = #tpu.dot_dimension_numbers<[1], [0], [0], [1], [0, 0, 1, 1], [], []>} : vector<32x128xf32>, vector<128x128xf32>, vector<32x128xf32> -> vector<32x128xf32>
    %76 = arith.addf %74, %75 : vector<32x128xf32>
    %cst_67 = arith.constant 6.500000e-01 : f32
    %77 = vector.broadcast %cst_67 : f32 to vector<32x128xf32>
    %78 = arith.mulf %77, %24 : vector<32x128xf32>
    %cst_68 = arith.constant 1.000000e+00 : f32
    %79 = vector.broadcast %cst_68 : f32 to vector<32x128xf32>
    %80 = arith.mulf %79, %25 : vector<32x128xf32>
    %81 = arith.subf %78, %80 : vector<32x128xf32>
    %82 = vector.broadcast %17 : vector<1x128xf32> to vector<32x128xf32>
    %83 = arith.addf %76, %82 : vector<32x128xf32>
    %84 = arith.addf %83, %81 : vector<32x128xf32>
    %cst_69 = arith.constant 0.000000e+00 : f32
    %85 = vector.broadcast %cst_69 : f32 to vector<32x128xf32>
    %86 = arith.cmpf ogt, %84, %85 : vector<32x128xf32>
    %87 = arith.extui %86 : vector<32x128xi1> to vector<32x128xi32>
    %88 = arith.sitofp %87 : vector<32x128xi32> to vector<32x128xf32>
    %c0_70 = arith.constant 0 : index
    %c0_71 = arith.constant 0 : index
    %c0_72 = arith.constant 0 : index
    %89 = vector.load %arg15[%c0_70, %c0_71, %c0_72] : memref<3x32x128xf32, #tpu.memory_space<vmem>>, vector<1x32x128xf32>
    %90 = vector.shape_cast %89 : vector<1x32x128xf32> to vector<32x128xf32>
    %91 = vector.shape_cast %84 : vector<32x128xf32> to vector<1x32x128xf32>
    tpu.vector_store %arg15[%c0_70, %c0_71, %c0_72], %91 {strides = array<i32>} : memref<3x32x128xf32, #tpu.memory_space<vmem>>, vector<1x32x128xf32>,
    %c1_73 = arith.constant 1 : index
    %c0_74 = arith.constant 0 : index
    %c0_75 = arith.constant 0 : index
    %92 = vector.load %arg0[%c1_73, %c0_74, %c0_75] : memref<3x32x64xf32, #tpu.memory_space<vmem>>, vector<1x32x64xf32>
    %93 = vector.shape_cast %92 : vector<1x32x64xf32> to vector<32x64xf32>
    %cst_76 = arith.constant 8.500000e-01 : f32
    %94 = vector.broadcast %cst_76 : f32 to vector<32x64xf32>
    %95 = arith.mulf %94, %32 : vector<32x64xf32>
    %cst_77 = arith.constant 6.66666651 : f32
    %96 = vector.broadcast %cst_77 : f32 to vector<32x64xf32>
    %97 = arith.mulf %96, %93 : vector<32x64xf32>
    %98 = arith.addf %95, %97 : vector<32x64xf32>
    %cst_78 = arith.constant 0.899999976 : f32
    %99 = vector.broadcast %cst_78 : f32 to vector<32x64xf32>
    %100 = arith.mulf %99, %37 : vector<32x64xf32>
    %cst_79 = arith.constant 1.000000e+01 : f32
    %101 = vector.broadcast %cst_79 : f32 to vector<32x64xf32>
    %102 = arith.mulf %101, %32 : vector<32x64xf32>
    %103 = arith.addf %100, %102 : vector<32x64xf32>
    %cst_80 = arith.constant dense<0.000000e+00> : vector<32x64xf32>
    %104 = tpu.matmul %1, %103, %cst_80 {dimension_numbers = #tpu.dot_dimension_numbers<[1], [0], [0], [1], [0, 0, 1, 1], [], []>} : vector<32x32xf32>, vector<32x64xf32>, vector<32x64xf32> -> vector<32x64xf32>
    %cst_81 = arith.constant dense<0.000000e+00> : vector<32x64xf32>
    %105 = tpu.matmul %3, %103, %cst_81 {dimension_numbers = #tpu.dot_dimension_numbers<[1], [0], [0], [1], [0, 0, 1, 1], [], []>} : vector<32x32xf32>, vector<32x64xf32>, vector<32x64xf32> -> vector<32x64xf32>
    %cst_82 = arith.constant dense<0.000000e+00> : vector<32x128xf32>
    %106 = tpu.matmul %104, %5, %cst_82 {dimension_numbers = #tpu.dot_dimension_numbers<[1], [0], [0], [1], [0, 0, 1, 1], [], []>} : vector<32x64xf32>, vector<64x128xf32>, vector<32x128xf32> -> vector<32x128xf32>
    %cst_83 = arith.constant dense<0.000000e+00> : vector<32x128xf32>
    %107 = tpu.matmul %103, %7, %cst_83 {dimension_numbers = #tpu.dot_dimension_numbers<[1], [0], [0], [1], [0, 0, 1, 1], [], []>} : vector<32x64xf32>, vector<64x128xf32>, vector<32x128xf32> -> vector<32x128xf32>
    %108 = arith.addf %106, %107 : vector<32x128xf32>
    %cst_84 = arith.constant dense<0.000000e+00> : vector<32x128xf32>
    %109 = tpu.matmul %105, %9, %cst_84 {dimension_numbers = #tpu.dot_dimension_numbers<[1], [0], [0], [1], [0, 0, 1, 1], [], []>} : vector<32x64xf32>, vector<64x128xf32>, vector<32x128xf32> -> vector<32x128xf32>
    %110 = arith.addf %108, %109 : vector<32x128xf32>
    %cst_85 = arith.constant 6.500000e-01 : f32
    %111 = vector.broadcast %cst_85 : f32 to vector<32x128xf32>
    %112 = arith.mulf %111, %49 : vector<32x128xf32>
    %cst_86 = arith.constant 1.000000e+00 : f32
    %113 = vector.broadcast %cst_86 : f32 to vector<32x128xf32>
    %114 = arith.mulf %113, %56 : vector<32x128xf32>
    %115 = arith.subf %112, %114 : vector<32x128xf32>
    %116 = vector.broadcast %16 : vector<1x128xf32> to vector<32x128xf32>
    %117 = arith.addf %110, %116 : vector<32x128xf32>
    %118 = arith.addf %117, %115 : vector<32x128xf32>
    %cst_87 = arith.constant 0.000000e+00 : f32
    %119 = vector.broadcast %cst_87 : f32 to vector<32x128xf32>
    %120 = arith.cmpf ogt, %118, %119 : vector<32x128xf32>
    %121 = arith.extui %120 : vector<32x128xi1> to vector<32x128xi32>
    %122 = arith.sitofp %121 : vector<32x128xi32> to vector<32x128xf32>
    %c1_88 = arith.constant 1 : index
    %c0_89 = arith.constant 0 : index
    %c0_90 = arith.constant 0 : index
    %123 = vector.load %arg14[%c1_88, %c0_89, %c0_90] : memref<3x32x128xf32, #tpu.memory_space<vmem>>, vector<1x32x128xf32>
    %124 = vector.shape_cast %123 : vector<1x32x128xf32> to vector<32x128xf32>
    %125 = vector.shape_cast %118 : vector<32x128xf32> to vector<1x32x128xf32>
    tpu.vector_store %arg14[%c1_88, %c0_89, %c0_90], %125 {strides = array<i32>} : memref<3x32x128xf32, #tpu.memory_space<vmem>>, vector<1x32x128xf32>,
    %cst_91 = arith.constant 8.500000e-01 : f32
    %126 = vector.broadcast %cst_91 : f32 to vector<32x128xf32>
    %127 = arith.mulf %126, %64 : vector<32x128xf32>
    %cst_92 = arith.constant 6.66666651 : f32
    %128 = vector.broadcast %cst_92 : f32 to vector<32x128xf32>
    %129 = arith.mulf %128, %122 : vector<32x128xf32>
    %130 = arith.addf %127, %129 : vector<32x128xf32>
    %cst_93 = arith.constant 0.899999976 : f32
    %131 = vector.broadcast %cst_93 : f32 to vector<32x128xf32>
    %132 = arith.mulf %131, %69 : vector<32x128xf32>
    %cst_94 = arith.constant 1.000000e+01 : f32
    %133 = vector.broadcast %cst_94 : f32 to vector<32x128xf32>
    %134 = arith.mulf %133, %64 : vector<32x128xf32>
    %135 = arith.addf %132, %134 : vector<32x128xf32>
    %cst_95 = arith.constant dense<0.000000e+00> : vector<32x128xf32>
    %136 = tpu.matmul %1, %135, %cst_95 {dimension_numbers = #tpu.dot_dimension_numbers<[1], [0], [0], [1], [0, 0, 1, 1], [], []>} : vector<32x32xf32>, vector<32x128xf32>, vector<32x128xf32> -> vector<32x128xf32>
    %cst_96 = arith.constant dense<0.000000e+00> : vector<32x128xf32>
    %137 = tpu.matmul %3, %135, %cst_96 {dimension_numbers = #tpu.dot_dimension_numbers<[1], [0], [0], [1], [0, 0, 1, 1], [], []>} : vector<32x32xf32>, vector<32x128xf32>, vector<32x128xf32> -> vector<32x128xf32>
    %cst_97 = arith.constant dense<0.000000e+00> : vector<32x128xf32>
    %138 = tpu.matmul %136, %11, %cst_97 {dimension_numbers = #tpu.dot_dimension_numbers<[1], [0], [0], [1], [0, 0, 1, 1], [], []>} : vector<32x128xf32>, vector<128x128xf32>, vector<32x128xf32> -> vector<32x128xf32>
    %cst_98 = arith.constant dense<0.000000e+00> : vector<32x128xf32>
    %139 = tpu.matmul %135, %13, %cst_98 {dimension_numbers = #tpu.dot_dimension_numbers<[1], [0], [0], [1], [0, 0, 1, 1], [], []>} : vector<32x128xf32>, vector<128x128xf32>, vector<32x128xf32> -> vector<32x128xf32>
    %140 = arith.addf %138, %139 : vector<32x128xf32>
    %cst_99 = arith.constant dense<0.000000e+00> : vector<32x128xf32>
    %141 = tpu.matmul %137, %15, %cst_99 {dimension_numbers = #tpu.dot_dimension_numbers<[1], [0], [0], [1], [0, 0, 1, 1], [], []>} : vector<32x128xf32>, vector<128x128xf32>, vector<32x128xf32> -> vector<32x128xf32>
    %142 = arith.addf %140, %141 : vector<32x128xf32>
    %cst_100 = arith.constant 6.500000e-01 : f32
    %143 = vector.broadcast %cst_100 : f32 to vector<32x128xf32>
    %144 = arith.mulf %143, %81 : vector<32x128xf32>
    %cst_101 = arith.constant 1.000000e+00 : f32
    %145 = vector.broadcast %cst_101 : f32 to vector<32x128xf32>
    %146 = arith.mulf %145, %88 : vector<32x128xf32>
    %147 = arith.subf %144, %146 : vector<32x128xf32>
    %148 = vector.broadcast %17 : vector<1x128xf32> to vector<32x128xf32>
    %149 = arith.addf %142, %148 : vector<32x128xf32>
    %150 = arith.addf %149, %147 : vector<32x128xf32>
    %cst_102 = arith.constant 0.000000e+00 : f32
    %151 = vector.broadcast %cst_102 : f32 to vector<32x128xf32>
    %152 = arith.cmpf ogt, %150, %151 : vector<32x128xf32>
    %153 = arith.extui %152 : vector<32x128xi1> to vector<32x128xi32>
    %154 = arith.sitofp %153 : vector<32x128xi32> to vector<32x128xf32>
    %c1_103 = arith.constant 1 : index
    %c0_104 = arith.constant 0 : index
    %c0_105 = arith.constant 0 : index
    %155 = vector.load %arg15[%c1_103, %c0_104, %c0_105] : memref<3x32x128xf32, #tpu.memory_space<vmem>>, vector<1x32x128xf32>
    %156 = vector.shape_cast %155 : vector<1x32x128xf32> to vector<32x128xf32>
    %157 = vector.shape_cast %150 : vector<32x128xf32> to vector<1x32x128xf32>
    tpu.vector_store %arg15[%c1_103, %c0_104, %c0_105], %157 {strides = array<i32>} : memref<3x32x128xf32, #tpu.memory_space<vmem>>, vector<1x32x128xf32>,
    %c2_106 = arith.constant 2 : index
    %c0_107 = arith.constant 0 : index
    %c0_108 = arith.constant 0 : index
    %158 = vector.load %arg0[%c2_106, %c0_107, %c0_108] : memref<3x32x64xf32, #tpu.memory_space<vmem>>, vector<1x32x64xf32>
    %159 = vector.shape_cast %158 : vector<1x32x64xf32> to vector<32x64xf32>
    %cst_109 = arith.constant 8.500000e-01 : f32
    %160 = vector.broadcast %cst_109 : f32 to vector<32x64xf32>
    %161 = arith.mulf %160, %98 : vector<32x64xf32>
    %cst_110 = arith.constant 6.66666651 : f32
    %162 = vector.broadcast %cst_110 : f32 to vector<32x64xf32>
    %163 = arith.mulf %162, %159 : vector<32x64xf32>
    %164 = arith.addf %161, %163 : vector<32x64xf32>
    %cst_111 = arith.constant 0.899999976 : f32
    %165 = vector.broadcast %cst_111 : f32 to vector<32x64xf32>
    %166 = arith.mulf %165, %103 : vector<32x64xf32>
    %cst_112 = arith.constant 1.000000e+01 : f32
    %167 = vector.broadcast %cst_112 : f32 to vector<32x64xf32>
    %168 = arith.mulf %167, %98 : vector<32x64xf32>
    %169 = arith.addf %166, %168 : vector<32x64xf32>
    %cst_113 = arith.constant dense<0.000000e+00> : vector<32x64xf32>
    %170 = tpu.matmul %1, %169, %cst_113 {dimension_numbers = #tpu.dot_dimension_numbers<[1], [0], [0], [1], [0, 0, 1, 1], [], []>} : vector<32x32xf32>, vector<32x64xf32>, vector<32x64xf32> -> vector<32x64xf32>
    %cst_114 = arith.constant dense<0.000000e+00> : vector<32x64xf32>
    %171 = tpu.matmul %3, %169, %cst_114 {dimension_numbers = #tpu.dot_dimension_numbers<[1], [0], [0], [1], [0, 0, 1, 1], [], []>} : vector<32x32xf32>, vector<32x64xf32>, vector<32x64xf32> -> vector<32x64xf32>
    %cst_115 = arith.constant dense<0.000000e+00> : vector<32x128xf32>
    %172 = tpu.matmul %170, %5, %cst_115 {dimension_numbers = #tpu.dot_dimension_numbers<[1], [0], [0], [1], [0, 0, 1, 1], [], []>} : vector<32x64xf32>, vector<64x128xf32>, vector<32x128xf32> -> vector<32x128xf32>
    %cst_116 = arith.constant dense<0.000000e+00> : vector<32x128xf32>
    %173 = tpu.matmul %169, %7, %cst_116 {dimension_numbers = #tpu.dot_dimension_numbers<[1], [0], [0], [1], [0, 0, 1, 1], [], []>} : vector<32x64xf32>, vector<64x128xf32>, vector<32x128xf32> -> vector<32x128xf32>
    %174 = arith.addf %172, %173 : vector<32x128xf32>
    %cst_117 = arith.constant dense<0.000000e+00> : vector<32x128xf32>
    %175 = tpu.matmul %171, %9, %cst_117 {dimension_numbers = #tpu.dot_dimension_numbers<[1], [0], [0], [1], [0, 0, 1, 1], [], []>} : vector<32x64xf32>, vector<64x128xf32>, vector<32x128xf32> -> vector<32x128xf32>
    %176 = arith.addf %174, %175 : vector<32x128xf32>
    %cst_118 = arith.constant 6.500000e-01 : f32
    %177 = vector.broadcast %cst_118 : f32 to vector<32x128xf32>
    %178 = arith.mulf %177, %115 : vector<32x128xf32>
    %cst_119 = arith.constant 1.000000e+00 : f32
    %179 = vector.broadcast %cst_119 : f32 to vector<32x128xf32>
    %180 = arith.mulf %179, %122 : vector<32x128xf32>
    %181 = arith.subf %178, %180 : vector<32x128xf32>
    %182 = vector.broadcast %16 : vector<1x128xf32> to vector<32x128xf32>
    %183 = arith.addf %176, %182 : vector<32x128xf32>
    %184 = arith.addf %183, %181 : vector<32x128xf32>
    %cst_120 = arith.constant 0.000000e+00 : f32
    %185 = vector.broadcast %cst_120 : f32 to vector<32x128xf32>
    %186 = arith.cmpf ogt, %184, %185 : vector<32x128xf32>
    %187 = arith.extui %186 : vector<32x128xi1> to vector<32x128xi32>
    %188 = arith.sitofp %187 : vector<32x128xi32> to vector<32x128xf32>
    %c2_121 = arith.constant 2 : index
    %c0_122 = arith.constant 0 : index
    %c0_123 = arith.constant 0 : index
    %189 = vector.load %arg14[%c2_121, %c0_122, %c0_123] : memref<3x32x128xf32, #tpu.memory_space<vmem>>, vector<1x32x128xf32>
    %190 = vector.shape_cast %189 : vector<1x32x128xf32> to vector<32x128xf32>
    %191 = vector.shape_cast %184 : vector<32x128xf32> to vector<1x32x128xf32>
    tpu.vector_store %arg14[%c2_121, %c0_122, %c0_123], %191 {strides = array<i32>} : memref<3x32x128xf32, #tpu.memory_space<vmem>>, vector<1x32x128xf32>,
    %cst_124 = arith.constant 8.500000e-01 : f32
    %192 = vector.broadcast %cst_124 : f32 to vector<32x128xf32>
    %193 = arith.mulf %192, %130 : vector<32x128xf32>
    %cst_125 = arith.constant 6.66666651 : f32
    %194 = vector.broadcast %cst_125 : f32 to vector<32x128xf32>
    %195 = arith.mulf %194, %188 : vector<32x128xf32>
    %196 = arith.addf %193, %195 : vector<32x128xf32>
    %cst_126 = arith.constant 0.899999976 : f32
    %197 = vector.broadcast %cst_126 : f32 to vector<32x128xf32>
    %198 = arith.mulf %197, %135 : vector<32x128xf32>
    %cst_127 = arith.constant 1.000000e+01 : f32
    %199 = vector.broadcast %cst_127 : f32 to vector<32x128xf32>
    %200 = arith.mulf %199, %130 : vector<32x128xf32>
    %201 = arith.addf %198, %200 : vector<32x128xf32>
    %cst_128 = arith.constant dense<0.000000e+00> : vector<32x128xf32>
    %202 = tpu.matmul %1, %201, %cst_128 {dimension_numbers = #tpu.dot_dimension_numbers<[1], [0], [0], [1], [0, 0, 1, 1], [], []>} : vector<32x32xf32>, vector<32x128xf32>, vector<32x128xf32> -> vector<32x128xf32>
    %cst_129 = arith.constant dense<0.000000e+00> : vector<32x128xf32>
    %203 = tpu.matmul %3, %201, %cst_129 {dimension_numbers = #tpu.dot_dimension_numbers<[1], [0], [0], [1], [0, 0, 1, 1], [], []>} : vector<32x32xf32>, vector<32x128xf32>, vector<32x128xf32> -> vector<32x128xf32>
    %cst_130 = arith.constant dense<0.000000e+00> : vector<32x128xf32>
    %204 = tpu.matmul %202, %11, %cst_130 {dimension_numbers = #tpu.dot_dimension_numbers<[1], [0], [0], [1], [0, 0, 1, 1], [], []>} : vector<32x128xf32>, vector<128x128xf32>, vector<32x128xf32> -> vector<32x128xf32>
    %cst_131 = arith.constant dense<0.000000e+00> : vector<32x128xf32>
    %205 = tpu.matmul %201, %13, %cst_131 {dimension_numbers = #tpu.dot_dimension_numbers<[1], [0], [0], [1], [0, 0, 1, 1], [], []>} : vector<32x128xf32>, vector<128x128xf32>, vector<32x128xf32> -> vector<32x128xf32>
    %206 = arith.addf %204, %205 : vector<32x128xf32>
    %cst_132 = arith.constant dense<0.000000e+00> : vector<32x128xf32>
    %207 = tpu.matmul %203, %15, %cst_132 {dimension_numbers = #tpu.dot_dimension_numbers<[1], [0], [0], [1], [0, 0, 1, 1], [], []>} : vector<32x128xf32>, vector<128x128xf32>, vector<32x128xf32> -> vector<32x128xf32>
    %208 = arith.addf %206, %207 : vector<32x128xf32>
    %cst_133 = arith.constant 6.500000e-01 : f32
    %209 = vector.broadcast %cst_133 : f32 to vector<32x128xf32>
    %210 = arith.mulf %209, %147 : vector<32x128xf32>
    %cst_134 = arith.constant 1.000000e+00 : f32
    %211 = vector.broadcast %cst_134 : f32 to vector<32x128xf32>
    %212 = arith.mulf %211, %154 : vector<32x128xf32>
    %213 = arith.subf %210, %212 : vector<32x128xf32>
    %214 = vector.broadcast %17 : vector<1x128xf32> to vector<32x128xf32>
    %215 = arith.addf %208, %214 : vector<32x128xf32>
    %216 = arith.addf %215, %213 : vector<32x128xf32>
    %cst_135 = arith.constant 0.000000e+00 : f32
    %217 = vector.broadcast %cst_135 : f32 to vector<32x128xf32>
    %218 = arith.cmpf ogt, %216, %217 : vector<32x128xf32>
    %219 = arith.extui %218 : vector<32x128xi1> to vector<32x128xi32>
    %220 = arith.sitofp %219 : vector<32x128xi32> to vector<32x128xf32>
    %c2_136 = arith.constant 2 : index
    %c0_137 = arith.constant 0 : index
    %c0_138 = arith.constant 0 : index
    %221 = vector.load %arg15[%c2_136, %c0_137, %c0_138] : memref<3x32x128xf32, #tpu.memory_space<vmem>>, vector<1x32x128xf32>
    %222 = vector.shape_cast %221 : vector<1x32x128xf32> to vector<32x128xf32>
    %223 = vector.shape_cast %216 : vector<32x128xf32> to vector<1x32x128xf32>
    tpu.vector_store %arg15[%c2_136, %c0_137, %c0_138], %223 {strides = array<i32>} : memref<3x32x128xf32, #tpu.memory_space<vmem>>, vector<1x32x128xf32>,
    %c0_139 = arith.constant 0 : index
    %c0_140 = arith.constant 0 : index
    %224 = vector.load %arg16[%c0_139, %c0_140] : memref<32x64xf32, #tpu.memory_space<vmem>>, vector<32x64xf32>
    tpu.vector_store %arg16[%c0_139, %c0_140], %164 {strides = array<i32>} : memref<32x64xf32, #tpu.memory_space<vmem>>, vector<32x64xf32>,
    %c0_141 = arith.constant 0 : index
    %c0_142 = arith.constant 0 : index
    %225 = vector.load %arg17[%c0_141, %c0_142] : memref<32x64xf32, #tpu.memory_space<vmem>>, vector<32x64xf32>
    tpu.vector_store %arg17[%c0_141, %c0_142], %169 {strides = array<i32>} : memref<32x64xf32, #tpu.memory_space<vmem>>, vector<32x64xf32>,
    %c0_143 = arith.constant 0 : index
    %c0_144 = arith.constant 0 : index
    %226 = vector.load %arg18[%c0_143, %c0_144] : memref<32x128xf32, #tpu.memory_space<vmem>>, vector<32x128xf32>
    tpu.vector_store %arg18[%c0_143, %c0_144], %181 {strides = array<i32>} : memref<32x128xf32, #tpu.memory_space<vmem>>, vector<32x128xf32>,
    %c0_145 = arith.constant 0 : index
    %c0_146 = arith.constant 0 : index
    %227 = vector.load %arg19[%c0_145, %c0_146] : memref<32x128xf32, #tpu.memory_space<vmem>>, vector<32x128xf32>
    tpu.vector_store %arg19[%c0_145, %c0_146], %188 {strides = array<i32>} : memref<32x128xf32, #tpu.memory_space<vmem>>, vector<32x128xf32>,
    %c0_147 = arith.constant 0 : index
    %c0_148 = arith.constant 0 : index
    %228 = vector.load %arg20[%c0_147, %c0_148] : memref<32x128xf32, #tpu.memory_space<vmem>>, vector<32x128xf32>
    tpu.vector_store %arg20[%c0_147, %c0_148], %196 {strides = array<i32>} : memref<32x128xf32, #tpu.memory_space<vmem>>, vector<32x128xf32>,
    %c0_149 = arith.constant 0 : index
    %c0_150 = arith.constant 0 : index
    %229 = vector.load %arg21[%c0_149, %c0_150] : memref<32x128xf32, #tpu.memory_space<vmem>>, vector<32x128xf32>
    tpu.vector_store %arg21[%c0_149, %c0_150], %201 {strides = array<i32>} : memref<32x128xf32, #tpu.memory_space<vmem>>, vector<32x128xf32>,
    %c0_151 = arith.constant 0 : index
    %c0_152 = arith.constant 0 : index
    %230 = vector.load %arg22[%c0_151, %c0_152] : memref<32x128xf32, #tpu.memory_space<vmem>>, vector<32x128xf32>
    tpu.vector_store %arg22[%c0_151, %c0_152], %213 {strides = array<i32>} : memref<32x128xf32, #tpu.memory_space<vmem>>, vector<32x128xf32>,
    %c0_153 = arith.constant 0 : index
    %c0_154 = arith.constant 0 : index
    %231 = vector.load %arg23[%c0_153, %c0_154] : memref<32x128xf32, #tpu.memory_space<vmem>>, vector<32x128xf32>
    tpu.vector_store %arg23[%c0_153, %c0_154], %220 {strides = array<i32>} : memref<32x128xf32, #tpu.memory_space<vmem>>, vector<32x128xf32>,
    return
  }
}

</mosaic_0001>

<llo_original>
// kernel: _burnin_impl.1
$region0: #{_burnin_impl.1}
  #allocation0 [shape = 'u32[]', space=smem, size = 0x4, offset = 0x4, fixed_abs, tag = 'smem constant byte address 0x4 - core index']
  #allocation1 [shape = 'u32[72,128]{1,0:T(1,128)}', space=vmem, size = 0x9000, scoped, tag = 'internal scratch']
  %s0 = inlined_call_operand.vmem [shape: f32[3,32,64], index: 0, kind: input, shape index: {}]
  %s1 = inlined_call_operand.vmem [shape: f32[32,64], index: 1, kind: input, shape index: {}, may-alias: {1,2}]
  %s2 = inlined_call_operand.vmem [shape: f32[32,64], index: 2, kind: input, shape index: {}, may-alias: {1,2}]
  %s3 = inlined_call_operand.vmem [shape: f32[32,128], index: 3, kind: input, shape index: {}, may-alias: {3,4,5,6,7,8}]
  %s4 = inlined_call_operand.vmem [shape: f32[32,128], index: 4, kind: input, shape index: {}, may-alias: {3,4,5,6,7,8}]
  %s5 = inlined_call_operand.vmem [shape: f32[32,128], index: 5, kind: input, shape index: {}, may-alias: {3,4,5,6,7,8}]
  %s6 = inlined_call_operand.vmem [shape: f32[32,128], index: 6, kind: input, shape index: {}, may-alias: {3,4,5,6,7,8}]
  %s7 = inlined_call_operand.vmem [shape: f32[32,128], index: 7, kind: input, shape index: {}, may-alias: {3,4,5,6,7,8}]
  %s8 = inlined_call_operand.vmem [shape: f32[32,128], index: 8, kind: input, shape index: {}, may-alias: {3,4,5,6,7,8}]
  %s9 = inlined_call_operand.vmem [shape: f32[2,32,32], index: 9, kind: input, shape index: {}]
  %s10 = inlined_call_operand.vmem [shape: f32[3,64,128], index: 10, kind: input, shape index: {}]
  %s11 = inlined_call_operand.vmem [shape: f32[1,128], index: 11, kind: input, shape index: {}]
  %s12 = inlined_call_operand.vmem [shape: f32[3,128,128], index: 12, kind: input, shape index: {}]
  %s13 = inlined_call_operand.vmem [shape: f32[1,128], index: 13, kind: input, shape index: {}]
  %s14 = inlined_call_operand.hbm [shape: f32[3,32,128], index: 14, kind: output, shape index: {0}]
  %s15 = inlined_call_operand.hbm [shape: f32[3,32,128], index: 15, kind: output, shape index: {1}]
  %s16 = inlined_call_operand.hbm [shape: f32[32,64], index: 16, kind: output, shape index: {2}]
  %s17 = inlined_call_operand.hbm [shape: f32[32,64], index: 17, kind: output, shape index: {3}]
  %s18 = inlined_call_operand.hbm [shape: f32[32,128], index: 18, kind: output, shape index: {4}]
  %s19 = inlined_call_operand.hbm [shape: f32[32,128], index: 19, kind: output, shape index: {5}]
  %s20 = inlined_call_operand.hbm [shape: f32[32,128], index: 20, kind: output, shape index: {6}]
  %s21 = inlined_call_operand.hbm [shape: f32[32,128], index: 21, kind: output, shape index: {7}]
  %s22 = inlined_call_operand.hbm [shape: f32[32,128], index: 22, kind: output, shape index: {8}]
  %s23 = inlined_call_operand.hbm [shape: f32[32,128], index: 23, kind: output, shape index: {9}]
  %24 = xla_tuple %s14, %s15, %s16, %s17, %s18, %s19, %s20, %s21, %s22, %s23
  %s25 = sld [smem:[#allocation0]]
  $region138: #{_burnin_impl.1} parent=0
    _
  %s27 = ssub.s32 1, %s25
  %s28 = scalar_select 0, %s27, %s25
  $region1: #{_burnin_impl.1} parent=0
    #allocation2 [shape = 'u8[49152]{0}', space=vmem, size = 0xc000, scoped, tag = 'output window, operand 0, single buffered']
    #allocation3 [shape = 's32[1]{0}', space=sflag, size = 0x4, scoped, tag = 'scoped memory for _burnin_impl.1']
    #allocation4 [shape = 'u8[49152]{0}', space=vmem, size = 0xc000, scoped, tag = 'output window, operand 1, single buffered']
    #allocation5 [shape = 's32[1]{0}', space=sflag, size = 0x4, scoped, tag = 'scoped memory for _burnin_impl.1']
    #allocation6 [shape = 'u8[16384]{0}', space=vmem, size = 0x4000, scoped, tag = 'output window, operand 2, single buffered']
    #allocation7 [shape = 'u8[16384]{0}', space=vmem, size = 0x4000, scoped, tag = 'output window, operand 3, single buffered']
    #allocation8 [shape = 's32[1]{0}', space=sflag, size = 0x4, scoped, tag = 'scoped memory for _burnin_impl.1']
    #allocation9 [shape = 'u8[16384]{0}', space=vmem, size = 0x4000, scoped, tag = 'output window, operand 4, single buffered']
    #allocation10 [shape = 'u8[16384]{0}', space=vmem, size = 0x4000, scoped, tag = 'output window, operand 5, single buffered']
    #allocation11 [shape = 's32[1]{0}', space=sflag, size = 0x4, scoped, tag = 'scoped memory for _burnin_impl.1']
    #allocation12 [shape = 'u8[16384]{0}', space=vmem, size = 0x4000, scoped, tag = 'output window, operand 6, single buffered']
    #allocation13 [shape = 'u8[16384]{0}', space=vmem, size = 0x4000, scoped, tag = 'output window, operand 7, single buffered']
    #allocation14 [shape = 's32[1]{0}', space=sflag, size = 0x4, scoped, tag = 'scoped memory for _burnin_impl.1']
    #allocation15 [shape = 'u8[16384]{0}', space=vmem, size = 0x4000, scoped, tag = 'output window, operand 8, single buffered']
    #allocation16 [shape = 'u8[16384]{0}', space=vmem, size = 0x4000, scoped, tag = 'output window, operand 9, single buffered']
    #allocation17 [shape = 's32[1]{0}', space=sflag, size = 0x4, scoped, tag = 'scoped memory for _burnin_impl.1']
    %29 = vsyncpa [#allocation3], 0
    %30 = vsyncpa [#allocation5], 0
    %31 = vsyncpa [#allocation8], 0
    %32 = vsyncpa [#allocation11], 0
    %33 = vsyncpa [#allocation14], 0
    %34 = vsyncpa [#allocation17], 0
    // Predicated region
    $region2: #{_burnin_impl.1} parent=1 // pred_check
      _
    $region3: #{_burnin_impl.1} parent=1 // pred_check_branch
      %36 = sbr.rel (0) target = $region5
    $region4: #{_burnin_impl.1} parent=1 // pred_region
      _
    $region5: #{_burnin_impl.1} parent=1 // pred_fallthru
      _
    // Predicated region
    $region6: #{_burnin_impl.1} parent=1 // pred_check
      _
    $region7: #{_burnin_impl.1} parent=1 // pred_check_branch
      %38 = sbr.rel (0) target = $region9
    $region8: #{_burnin_impl.1} parent=1 // pred_region
      _
    $region9: #{_burnin_impl.1} parent=1 // pred_fallthru
      _
    // Predicated region
    $region10: #{_burnin_impl.1} parent=1 // pred_check
      _
    $region11: #{_burnin_impl.1} parent=1 // pred_check_branch
      %40 = sbr.rel (0) target = $region13
    $region12: #{_burnin_impl.1} parent=1 // pred_region
      _
    $region13: #{_burnin_impl.1} parent=1 // pred_fallthru
      _
    // Predicated region
    $region14: #{_burnin_impl.1} parent=1 // pred_check
      _
    $region15: #{_burnin_impl.1} parent=1 // pred_check_branch
      %42 = sbr.rel (0) target = $region17
    $region16: #{_burnin_impl.1} parent=1 // pred_region
      _
    $region17: #{_burnin_impl.1} parent=1 // pred_fallthru
      _
    // Predicated region
    $region18: #{_burnin_impl.1} parent=1 // pred_check
      _
    $region19: #{_burnin_impl.1} parent=1 // pred_check_branch
      %44 = sbr.rel (0) target = $region21
    $region20: #{_burnin_impl.1} parent=1 // pred_region
      _
    $region21: #{_burnin_impl.1} parent=1 // pred_fallthru
      _
    // Predicated region
    $region22: #{_burnin_impl.1} parent=1 // pred_check
      _
    $region23: #{_burnin_impl.1} parent=1 // pred_check_branch
      %46 = sbr.rel (0) target = $region25
    $region24: #{_burnin_impl.1} parent=1 // pred_region
      _
    $region25: #{_burnin_impl.1} parent=1 // pred_fallthru
      _
    // Predicated region
    $region26: #{_burnin_impl.1} parent=1 // pred_check
      _
    $region27: #{_burnin_impl.1} parent=1 // pred_check_branch
      %48 = sbr.rel (0) target = $region29
    $region28: #{_burnin_impl.1} parent=1 // pred_region
      _
    $region29: #{_burnin_impl.1} parent=1 // pred_fallthru
      _
    // Predicated region
    $region30: #{_burnin_impl.1} parent=1 // pred_check
      _
    $region31: #{_burnin_impl.1} parent=1 // pred_check_branch
      %50 = sbr.rel (0) target = $region33
    $region32: #{_burnin_impl.1} parent=1 // pred_region
      _
    $region33: #{_burnin_impl.1} parent=1 // pred_fallthru
      _
    // Predicated region
    $region34: #{_burnin_impl.1} parent=1 // pred_check
      _
    $region35: #{_burnin_impl.1} parent=1 // pred_check_branch
      %52 = sbr.rel (0) target = $region37
    $region36: #{_burnin_impl.1} parent=1 // pred_region
      _
    $region37: #{_burnin_impl.1} parent=1 // pred_fallthru
      _
    // Predicated region
    $region38: #{_burnin_impl.1} parent=1 // pred_check
      _
    $region39: #{_burnin_impl.1} parent=1 // pred_check_branch
      %54 = sbr.rel (0) target = $region41
    $region40: #{_burnin_impl.1} parent=1 // pred_region
      _
    $region41: #{_burnin_impl.1} parent=1 // pred_fallthru
      _
    // Predicated region
    $region42: #{_burnin_impl.1} parent=1 // pred_check
      _
    $region43: #{_burnin_impl.1} parent=1 // pred_check_branch
      %56 = sbr.rel (0) target = $region45
    $region44: #{_burnin_impl.1} parent=1 // pred_region
      _
    $region45: #{_burnin_impl.1} parent=1 // pred_fallthru
      _
    // Predicated region
    $region46: #{_burnin_impl.1} parent=1 // pred_check
      _
    $region47: #{_burnin_impl.1} parent=1 // pred_check_branch
      %58 = sbr.rel (0) target = $region49
    $region48: #{_burnin_impl.1} parent=1 // pred_region
      _
    $region49: #{_burnin_impl.1} parent=1 // pred_fallthru
      _
    // Predicated region
    $region50: #{_burnin_impl.1} parent=1 // pred_check
      _
    $region51: #{_burnin_impl.1} parent=1 // pred_check_branch
      %60 = sbr.rel (0) target = $region53
    $region52: #{_burnin_impl.1} parent=1 // pred_region
      _
    $region53: #{_burnin_impl.1} parent=1 // pred_fallthru
      _
    // Predicated region
    $region54: #{_burnin_impl.1} parent=1 // pred_check
      _
    $region55: #{_burnin_impl.1} parent=1 // pred_check_branch
      %62 = sbr.rel (0) target = $region57
    $region56: #{_burnin_impl.1} parent=1 // pred_region
      _
    $region57: #{_burnin_impl.1} parent=1 // pred_fallthru
      _
    %v63 = vld [vmem:[%s9] sm:$0xff]
    %v64 = vld [vmem:[%s9 + $0x8] sm:$0xff]
    %v65 = vld [vmem:[%s9 + $0x10] sm:$0xff]
    %v66 = vld [vmem:[%s9 + $0x18] sm:$0xff]
    %s67 = scalar_lea.vmem %s9, 32
    %v68 = vld [vmem:[%s67] sm:$0xff]
    %v69 = vld [vmem:[%s67 + $0x8] sm:$0xff]
    %v70 = vld [vmem:[%s67 + $0x10] sm:$0xff]
    %v71 = vld [vmem:[%s67 + $0x18] sm:$0xff]
    %v72 = vld [vmem:[%s10] sm:$0xff]
    %v73 = vld [vmem:[%s10 + $0x8] sm:$0xff]
    %v74 = vld [vmem:[%s10 + $0x10] sm:$0xff]
    %v75 = vld [vmem:[%s10 + $0x18] sm:$0xff]
    %v76 = vld [vmem:[%s10 + $0x20] sm:$0xff]
    %v77 = vld [vmem:[%s10 + $0x28] sm:$0xff]
    %v78 = vld [vmem:[%s10 + $0x30] sm:$0xff]
    %v79 = vld [vmem:[%s10 + $0x38] sm:$0xff]
    %s80 = scalar_lea.vmem %s10, 64
    %v81 = vld [vmem:[%s80] sm:$0xff]
    %v82 = vld [vmem:[%s80 + $0x8] sm:$0xff]
    %v83 = vld [vmem:[%s80 + $0x10] sm:$0xff]
    %v84 = vld [vmem:[%s80 + $0x18] sm:$0xff]
    %v85 = vld [vmem:[%s80 + $0x20] sm:$0xff]
    %v86 = vld [vmem:[%s80 + $0x28] sm:$0xff]
    %v87 = vld [vmem:[%s80 + $0x30] sm:$0xff]
    %v88 = vld [vmem:[%s80 + $0x38] sm:$0xff]
    %s89 = scalar_lea.vmem %s10, 128
    %v90 = vld [vmem:[%s89] sm:$0xff]
    %v91 = vld [vmem:[%s89 + $0x8] sm:$0xff]
    %v92 = vld [vmem:[%s89 + $0x10] sm:$0xff]
    %v93 = vld [vmem:[%s89 + $0x18] sm:$0xff]
    %v94 = vld [vmem:[%s89 + $0x20] sm:$0xff]
    %v95 = vld [vmem:[%s89 + $0x28] sm:$0xff]
    %v96 = vld [vmem:[%s89 + $0x30] sm:$0xff]
    %v97 = vld [vmem:[%s89 + $0x38] sm:$0xff]
    %v98 = vld [vmem:[%s12] sm:$0xff]
    %v99 = vld [vmem:[%s12 + $0x8] sm:$0xff]
    %v100 = vld [vmem:[%s12 + $0x10] sm:$0xff]
    %v101 = vld [vmem:[%s12 + $0x18] sm:$0xff]
    %v102 = vld [vmem:[%s12 + $0x20] sm:$0xff]
    %v103 = vld [vmem:[%s12 + $0x28] sm:$0xff]
    %v104 = vld [vmem:[%s12 + $0x30] sm:$0xff]
    %v105 = vld [vmem:[%s12 + $0x38] sm:$0xff]
    %v106 = vld [vmem:[%s12 + $0x40] sm:$0xff]
    %v107 = vld [vmem:[%s12 + $0x48] sm:$0xff]
    %v108 = vld [vmem:[%s12 + $0x50] sm:$0xff]
    %v109 = vld [vmem:[%s12 + $0x58] sm:$0xff]
    %v110 = vld [vmem:[%s12 + $0x60] sm:$0xff]
    %v111 = vld [vmem:[%s12 + $0x68] sm:$0xff]
    %v112 = vld [vmem:[%s12 + $0x70] sm:$0xff]
    %v113 = vld [vmem:[%s12 + $0x78] sm:$0xff]
    %s114 = scalar_lea.vmem %s12, 128
    %v115 = vld [vmem:[%s114] sm:$0xff]
    %v116 = vld [vmem:[%s114 + $0x8] sm:$0xff]
    %v117 = vld [vmem:[%s114 + $0x10] sm:$0xff]
    %v118 = vld [vmem:[%s114 + $0x18] sm:$0xff]
    %v119 = vld [vmem:[%s114 + $0x20] sm:$0xff]
    %v120 = vld [vmem:[%s114 + $0x28] sm:$0xff]
    %v121 = vld [vmem:[%s114 + $0x30] sm:$0xff]
    %v122 = vld [vmem:[%s114 + $0x38] sm:$0xff]
    %v123 = vld [vmem:[%s114 + $0x40] sm:$0xff]
    %v124 = vld [vmem:[%s114 + $0x48] sm:$0xff]
    %v125 = vld [vmem:[%s114 + $0x50] sm:$0xff]
    %v126 = vld [vmem:[%s114 + $0x58] sm:$0xff]
    %v127 = vld [vmem:[%s114 + $0x60] sm:$0xff]
    %v128 = vld [vmem:[%s114 + $0x68] sm:$0xff]
    %v129 = vld [vmem:[%s114 + $0x70] sm:$0xff]
    %v130 = vld [vmem:[%s114 + $0x78] sm:$0xff]
    %s131 = scalar_lea.vmem %s12, 256
    %v132 = vld [vmem:[%s131] sm:$0xff]
    %v133 = vld [vmem:[%s131 + $0x8] sm:$0xff]
    %v134 = vld [vmem:[%s131 + $0x10] sm:$0xff]
    %v135 = vld [vmem:[%s131 + $0x18] sm:$0xff]
    %v136 = vld [vmem:[%s131 + $0x20] sm:$0xff]
    %v137 = vld [vmem:[%s131 + $0x28] sm:$0xff]
    %v138 = vld [vmem:[%s131 + $0x30] sm:$0xff]
    %v139 = vld [vmem:[%s131 + $0x38] sm:$0xff]
    %v140 = vld [vmem:[%s131 + $0x40] sm:$0xff]
    %v141 = vld [vmem:[%s131 + $0x48] sm:$0xff]
    %v142 = vld [vmem:[%s131 + $0x50] sm:$0xff]
    %v143 = vld [vmem:[%s131 + $0x58] sm:$0xff]
    %v144 = vld [vmem:[%s131 + $0x60] sm:$0xff]
    %v145 = vld [vmem:[%s131 + $0x68] sm:$0xff]
    %v146 = vld [vmem:[%s131 + $0x70] sm:$0xff]
    %v147 = vld [vmem:[%s131 + $0x78] sm:$0xff]
    %v148 = vld [vmem:[%s11] sm:$0x1]
    %v149 = vld [vmem:[%s13] sm:$0x1]
    %v150 = vld [vmem:[%s1] sm:$0xff]
    %v151 = vld [vmem:[%s1 + $0x8] sm:$0xff]
    %v152 = vld [vmem:[%s1 + $0x10] sm:$0xff]
    %v153 = vld [vmem:[%s1 + $0x18] sm:$0xff]
    %v154 = vld [vmem:[%s2] sm:$0xff]
    %v155 = vld [vmem:[%s2 + $0x8] sm:$0xff]
    %v156 = vld [vmem:[%s2 + $0x10] sm:$0xff]
    %v157 = vld [vmem:[%s2 + $0x18] sm:$0xff]
    %v158 = vld [vmem:[%s3] sm:$0xff]
    %v159 = vld [vmem:[%s3 + $0x8] sm:$0xff]
    %v160 = vld [vmem:[%s3 + $0x10] sm:$0xff]
    %v161 = vld [vmem:[%s3 + $0x18] sm:$0xff]
    %v162 = vld [vmem:[%s4] sm:$0xff]
    %v163 = vld [vmem:[%s4 + $0x8] sm:$0xff]
    %v164 = vld [vmem:[%s4 + $0x10] sm:$0xff]
    %v165 = vld [vmem:[%s4 + $0x18] sm:$0xff]
    %v166 = vld [vmem:[%s5] sm:$0xff]
    %v167 = vld [vmem:[%s5 + $0x8] sm:$0xff]
    %v168 = vld [vmem:[%s5 + $0x10] sm:$0xff]
    %v169 = vld [vmem:[%s5 + $0x18] sm:$0xff]
    %v170 = vld [vmem:[%s6] sm:$0xff]
    %v171 = vld [vmem:[%s6 + $0x8] sm:$0xff]
    %v172 = vld [vmem:[%s6 + $0x10] sm:$0xff]
    %v173 = vld [vmem:[%s6 + $0x18] sm:$0xff]
    %v174 = vld [vmem:[%s7] sm:$0xff]
    %v175 = vld [vmem:[%s7 + $0x8] sm:$0xff]
    %v176 = vld [vmem:[%s7 + $0x10] sm:$0xff]
    %v177 = vld [vmem:[%s7 + $0x18] sm:$0xff]
    %v178 = vld [vmem:[%s8] sm:$0xff]
    %v179 = vld [vmem:[%s8 + $0x8] sm:$0xff]
    %v180 = vld [vmem:[%s8 + $0x10] sm:$0xff]
    %v181 = vld [vmem:[%s8 + $0x18] sm:$0xff]
    %v182 = vld [vmem:[%s0] sm:$0xff]
    %v183 = vld [vmem:[%s0 + $0x8] sm:$0xff]
    %v184 = vld [vmem:[%s0 + $0x10] sm:$0xff]
    %v185 = vld [vmem:[%s0 + $0x18] sm:$0xff]
    %v186 = vmul.f32 %v150, 0.85
    %v187 = vmul.f32 %v151, 0.85
    %v188 = vmul.f32 %v152, 0.85
    %v189 = vmul.f32 %v153, 0.85
    %v190 = vmul.f32 %v182, 6.6666665
    %v191 = vmul.f32 %v183, 6.6666665
    %v192 = vmul.f32 %v184, 6.6666665
    %v193 = vmul.f32 %v185, 6.6666665
    %v194 = vadd.f32 %v186, %v190
    %v195 = vadd.f32 %v187, %v191
    %v196 = vadd.f32 %v188, %v192
    %v197 = vadd.f32 %v189, %v193
    %v198 = vmul.f32 %v154, 0.9
    %v199 = vmul.f32 %v155, 0.9
    %v200 = vmul.f32 %v156, 0.9
    %v201 = vmul.f32 %v157, 0.9
    %v202 = vmul.f32 %v150, 10.0
    %v203 = vmul.f32 %v151, 10.0
    %v204 = vmul.f32 %v152, 10.0
    %v205 = vmul.f32 %v153, 10.0
    %v206 = vadd.f32 %v198, %v202
    %v207 = vadd.f32 %v199, %v203
    %v208 = vadd.f32 %v200, %v204
    %v209 = vadd.f32 %v201, %v205
    %vm210 = vcmask 261120
    %v212 = vsel %vm210, %v63, 0
    %v215 = vsel %vm210, %v64, 0
    %v218 = vsel %vm210, %v65, 0
    %v221 = vsel %vm210, %v66, 0
    %223 = vmatpush.msra.mxu0 0.0
    %224 = vmatpush.msra.mxu0 0.0
    %225 = vmatpush.msra.mxu0 0.0
    %226 = vmatpush.msra.mxu0 0.0
    %227 = vmatpush.msra.mxu0 0.0
    %228 = vmatpush.msra.mxu0 0.0
    %229 = vmatpush.msra.mxu0 0.0
    %230 = vmatpush.msra.mxu0 0.0
    %231 = vmatpush.msra.mxu0 0.0
    %232 = vmatpush.msra.mxu0 0.0
    %233 = vmatpush.msra.mxu0 0.0
    %234 = vmatpush.msra.mxu0 0.0
    %235 = vmatpush.msra.mxu0 %v209
    %236 = vmatpush.msra.mxu0 %v208
    %237 = vmatpush.msra.mxu0 %v207
    %238 = vmatpush.msra.mxu0 %v206
    %239 = vmatmul.f32.gmra.mxu0 %v212
    %v240 = vpop.f32.mrf.mxu0
    %v241 = vadd.f32 0.0, %v240
    %242 = vmatmul.f32.gmra.mxu0 %v215
    %v243 = vpop.f32.mrf.mxu0
    %v244 = vadd.f32 0.0, %v243
    %245 = vmatmul.f32.gmra.mxu0 %v218
    %v246 = vpop.f32.mrf.mxu0
    %v247 = vadd.f32 0.0, %v246
    %248 = vmatmul.f32.gmra.mxu0 %v221
    %v249 = vpop.f32.mrf.mxu0
    %v250 = vadd.f32 0.0, %v249
    %251 = vdwg.mxu0
    %v253 = vsel %vm210, %v68, 0
    %v256 = vsel %vm210, %v69, 0
    %v259 = vsel %vm210, %v70, 0
    %v262 = vsel %vm210, %v71, 0
    %264 = vmatpush.msra.mxu0 0.0
    %265 = vmatpush.msra.mxu0 0.0
    %266 = vmatpush.msra.mxu0 0.0
    %267 = vmatpush.msra.mxu0 0.0
    %268 = vmatpush.msra.mxu0 0.0
    %269 = vmatpush.msra.mxu0 0.0
    %270 = vmatpush.msra.mxu0 0.0
    %271 = vmatpush.msra.mxu0 0.0
    %272 = vmatpush.msra.mxu0 0.0
    %273 = vmatpush.msra.mxu0 0.0
    %274 = vmatpush.msra.mxu0 0.0
    %275 = vmatpush.msra.mxu0 0.0
    %276 = vmatpush.msra.mxu0 %v209
    %277 = vmatpush.msra.mxu0 %v208
    %278 = vmatpush.msra.mxu0 %v207
    %279 = vmatpush.msra.mxu0 %v206
    %280 = vmatmul.f32.gmra.mxu0 %v253
    %v281 = vpop.f32.mrf.mxu0
    %v282 = vadd.f32 0.0, %v281
    %283 = vmatmul.f32.gmra.mxu0 %v256
    %v284 = vpop.f32.mrf.mxu0
    %v285 = vadd.f32 0.0, %v284
    %286 = vmatmul.f32.gmra.mxu0 %v259
    %v287 = vpop.f32.mrf.mxu0
    %v288 = vadd.f32 0.0, %v287
    %289 = vmatmul.f32.gmra.mxu0 %v262
    %v290 = vpop.f32.mrf.mxu0
    %v291 = vadd.f32 0.0, %v290
    %292 = vdwg.mxu0
    %vm293 = vcmask 523264
    %v295 = vsel %vm293, %v206, 0
    %v298 = vsel %vm293, %v207, 0
    %v301 = vsel %vm293, %v208, 0
    %v304 = vsel %vm293, %v209, 0
    %306 = vmatpush.msra.mxu0 0.0
    %307 = vmatpush.msra.mxu0 0.0
    %308 = vmatpush.msra.mxu0 0.0
    %309 = vmatpush.msra.mxu0 0.0
    %310 = vmatpush.msra.mxu0 0.0
    %311 = vmatpush.msra.mxu0 0.0
    %312 = vmatpush.msra.mxu0 0.0
    %313 = vmatpush.msra.mxu0 0.0
    %314 = vmatpush.msra.mxu0 %v88
    %315 = vmatpush.msra.mxu0 %v87
    %316 = vmatpush.msra.mxu0 %v86
    %317 = vmatpush.msra.mxu0 %v85
    %318 = vmatpush.msra.mxu0 %v84
    %319 = vmatpush.msra.mxu0 %v83
    %320 = vmatpush.msra.mxu0 %v82
    %321 = vmatpush.msra.mxu0 %v81
    %322 = vmatmul.f32.gmra.mxu0 %v295
    %v323 = vpop.f32.mrf.mxu0
    %v324 = vadd.f32 0.0, %v323
    %325 = vmatmul.f32.gmra.mxu0 %v298
    %v326 = vpop.f32.mrf.mxu0
    %v327 = vadd.f32 0.0, %v326
    %328 = vmatmul.f32.gmra.mxu0 %v301
    %v329 = vpop.f32.mrf.mxu0
    %v330 = vadd.f32 0.0, %v329
    %331 = vmatmul.f32.gmra.mxu0 %v304
    %v332 = vpop.f32.mrf.mxu0
    %v333 = vadd.f32 0.0, %v332
    %334 = vdwg.mxu0
    %v336 = vsel %vm293, %v241, 0
    %v339 = vsel %vm293, %v244, 0
    %v342 = vsel %vm293, %v247, 0
    %v345 = vsel %vm293, %v250, 0
    %347 = vmatpush.msra.mxu0 0.0
    %348 = vmatpush.msra.mxu0 0.0
    %349 = vmatpush.msra.mxu0 0.0
    %350 = vmatpush.msra.mxu0 0.0
    %351 = vmatpush.msra.mxu0 0.0
    %352 = vmatpush.msra.mxu0 0.0
    %353 = vmatpush.msra.mxu0 0.0
    %354 = vmatpush.msra.mxu0 0.0
    %355 = vmatpush.msra.mxu0 %v79
    %356 = vmatpush.msra.mxu0 %v78
    %357 = vmatpush.msra.mxu0 %v77
    %358 = vmatpush.msra.mxu0 %v76
    %359 = vmatpush.msra.mxu0 %v75
    %360 = vmatpush.msra.mxu0 %v74
    %361 = vmatpush.msra.mxu0 %v73
    %362 = vmatpush.msra.mxu0 %v72
    %363 = vmatmul.f32.gmra.mxu0 %v336
    %v364 = vpop.f32.mrf.mxu0
    %v365 = vadd.f32 %v324, %v364
    %366 = vmatmul.f32.gmra.mxu0 %v339
    %v367 = vpop.f32.mrf.mxu0
    %v368 = vadd.f32 %v327, %v367
    %369 = vmatmul.f32.gmra.mxu0 %v342
    %v370 = vpop.f32.mrf.mxu0
    %v371 = vadd.f32 %v330, %v370
    %372 = vmatmul.f32.gmra.mxu0 %v345
    %v373 = vpop.f32.mrf.mxu0
    %v374 = vadd.f32 %v333, %v373
    %375 = vdwg.mxu0
    %v377 = vsel %vm293, %v282, 0
    %v380 = vsel %vm293, %v285, 0
    %v383 = vsel %vm293, %v288, 0
    %v386 = vsel %vm293, %v291, 0
    %388 = vmatpush.msra.mxu0 0.0
    %389 = vmatpush.msra.mxu0 0.0
    %390 = vmatpush.msra.mxu0 0.0
    %391 = vmatpush.msra.mxu0 0.0
    %392 = vmatpush.msra.mxu0 0.0
    %393 = vmatpush.msra.mxu0 0.0
    %394 = vmatpush.msra.mxu0 0.0
    %395 = vmatpush.msra.mxu0 0.0
    %396 = vmatpush.msra.mxu0 %v97
    %397 = vmatpush.msra.mxu0 %v96
    %398 = vmatpush.msra.mxu0 %v95
    %399 = vmatpush.msra.mxu0 %v94
    %400 = vmatpush.msra.mxu0 %v93
    %401 = vmatpush.msra.mxu0 %v92
    %402 = vmatpush.msra.mxu0 %v91
    %403 = vmatpush.msra.mxu0 %v90
    %404 = vmatmul.f32.gmra.mxu0 %v377
    %v405 = vpop.f32.mrf.mxu0
    %v406 = vadd.f32 0.0, %v405
    %407 = vmatmul.f32.gmra.mxu0 %v380
    %v408 = vpop.f32.mrf.mxu0
    %v409 = vadd.f32 0.0, %v408
    %410 = vmatmul.f32.gmra.mxu0 %v383
    %v411 = vpop.f32.mrf.mxu0
    %v412 = vadd.f32 0.0, %v411
    %413 = vmatmul.f32.gmra.mxu0 %v386
    %v414 = vpop.f32.mrf.mxu0
    %v415 = vadd.f32 0.0, %v414
    %416 = vdwg.mxu0
    %v417 = vadd.f32 %v365, %v406
    %v418 = vadd.f32 %v368, %v409
    %v419 = vadd.f32 %v371, %v412
    %v420 = vadd.f32 %v374, %v415
    %v421 = vmul.f32 %v158, 0.65
    %v422 = vmul.f32 %v159, 0.65
    %v423 = vmul.f32 %v160, 0.65
    %v424 = vmul.f32 %v161, 0.65
    %v425 = vsub.f32 %v421, %v162
    %v426 = vsub.f32 %v422, %v163
    %v427 = vsub.f32 %v423, %v164
    %v428 = vsub.f32 %v424, %v165
    %v430 = vperm.slane %v148, 0
    %v432 = vadd.f32 %v417, %v430
    %v433 = vadd.f32 %v418, %v430
    %v434 = vadd.f32 %v419, %v430
    %v435 = vadd.f32 %v420, %v430
    %v436 = vadd.f32 %v432, %v425
    %v437 = vadd.f32 %v433, %v426
    %v438 = vadd.f32 %v434, %v427
    %v439 = vadd.f32 %v435, %v428
    %vm440 = vcmp.gt.f32.partialorder %v436, 0.0
    %vm441 = vcmp.gt.f32.partialorder %v437, 0.0
    %vm442 = vcmp.gt.f32.partialorder %v438, 0.0
    %vm443 = vcmp.gt.f32.partialorder %v439, 0.0
    %v444 = vsel %vm440, 1, 0
    %v445 = vsel %vm441, 1, 0
    %v446 = vsel %vm442, 1, 0
    %v447 = vsel %vm443, 1, 0
    %v448 = vcvt.s32.f32 %v444
    %v449 = vcvt.s32.f32 %v445
    %v450 = vcvt.s32.f32 %v446
    %v451 = vcvt.s32.f32 %v447
    %452 = vst [vmem:[#allocation2] sm:$0xff] %v436
    %453 = vst [vmem:[#allocation2 + $0x8] sm:$0xff] %v437
    %454 = vst [vmem:[#allocation2 + $0x10] sm:$0xff] %v438
    %455 = vst [vmem:[#allocation2 + $0x18] sm:$0xff] %v439
    %v456 = vmul.f32 %v166, 0.85
    %v457 = vmul.f32 %v167, 0.85
    %v458 = vmul.f32 %v168, 0.85
    %v459 = vmul.f32 %v169, 0.85
    %v460 = vmul.f32 %v448, 6.6666665
    %v461 = vmul.f32 %v449, 6.6666665
    %v462 = vmul.f32 %v450, 6.6666665
    %v463 = vmul.f32 %v451, 6.6666665
    %v464 = vadd.f32 %v456, %v460
    %v465 = vadd.f32 %v457, %v461
    %v466 = vadd.f32 %v458, %v462
    %v467 = vadd.f32 %v459, %v463
    %v468 = vmul.f32 %v170, 0.9
    %v469 = vmul.f32 %v171, 0.9
    %v470 = vmul.f32 %v172, 0.9
    %v471 = vmul.f32 %v173, 0.9
    %v472 = vmul.f32 %v166, 10.0
    %v473 = vmul.f32 %v167, 10.0
    %v474 = vmul.f32 %v168, 10.0
    %v475 = vmul.f32 %v169, 10.0
    %v476 = vadd.f32 %v468, %v472
    %v477 = vadd.f32 %v469, %v473
    %v478 = vadd.f32 %v470, %v474
    %v479 = vadd.f32 %v471, %v475
    %480 = vmatpush.msra.mxu0 0.0
    %481 = vmatpush.msra.mxu0 0.0
    %482 = vmatpush.msra.mxu0 0.0
    %483 = vmatpush.msra.mxu0 0.0
    %484 = vmatpush.msra.mxu0 0.0
    %485 = vmatpush.msra.mxu0 0.0
    %486 = vmatpush.msra.mxu0 0.0
    %487 = vmatpush.msra.mxu0 0.0
    %488 = vmatpush.msra.mxu0 0.0
    %489 = vmatpush.msra.mxu0 0.0
    %490 = vmatpush.msra.mxu0 0.0
    %491 = vmatpush.msra.mxu0 0.0
    %492 = vmatpush.msra.mxu0 %v479
    %493 = vmatpush.msra.mxu0 %v478
    %494 = vmatpush.msra.mxu0 %v477
    %495 = vmatpush.msra.mxu0 %v476
    %496 = vmatmul.f32.gmra.mxu0 %v212
    %v497 = vpop.f32.mrf.mxu0
    %v498 = vadd.f32 0.0, %v497
    %499 = vmatmul.f32.gmra.mxu0 %v215
    %v500 = vpop.f32.mrf.mxu0
    %v501 = vadd.f32 0.0, %v500
    %502 = vmatmul.f32.gmra.mxu0 %v218
    %v503 = vpop.f32.mrf.mxu0
    %v504 = vadd.f32 0.0, %v503
    %505 = vmatmul.f32.gmra.mxu0 %v221
    %v506 = vpop.f32.mrf.mxu0
    %v507 = vadd.f32 0.0, %v506
    %508 = vdwg.mxu0
    %509 = vmatpush.msra.mxu0 0.0
    %510 = vmatpush.msra.mxu0 0.0
    %511 = vmatpush.msra.mxu0 0.0
    %512 = vmatpush.msra.mxu0 0.0
    %513 = vmatpush.msra.mxu0 0.0
    %514 = vmatpush.msra.mxu0 0.0
    %515 = vmatpush.msra.mxu0 0.0
    %516 = vmatpush.msra.mxu0 0.0
    %517 = vmatpush.msra.mxu0 0.0
    %518 = vmatpush.msra.mxu0 0.0
    %519 = vmatpush.msra.mxu0 0.0
    %520 = vmatpush.msra.mxu0 0.0
    %521 = vmatpush.msra.mxu0 %v479
    %522 = vmatpush.msra.mxu0 %v478
    %523 = vmatpush.msra.mxu0 %v477
    %524 = vmatpush.msra.mxu0 %v476
    %525 = vmatmul.f32.gmra.mxu0 %v253
    %v526 = vpop.f32.mrf.mxu0
    %v527 = vadd.f32 0.0, %v526
    %528 = vmatmul.f32.gmra.mxu0 %v256
    %v529 = vpop.f32.mrf.mxu0
    %v530 = vadd.f32 0.0, %v529
    %531 = vmatmul.f32.gmra.mxu0 %v259
    %v532 = vpop.f32.mrf.mxu0
    %v533 = vadd.f32 0.0, %v532
    %534 = vmatmul.f32.gmra.mxu0 %v262
    %v535 = vpop.f32.mrf.mxu0
    %v536 = vadd.f32 0.0, %v535
    %537 = vdwg.mxu0
    %538 = vmatpush.msra.mxu0 %v130
    %539 = vmatpush.msra.mxu0 %v129
    %540 = vmatpush.msra.mxu0 %v128
    %541 = vmatpush.msra.mxu0 %v127
    %542 = vmatpush.msra.mxu0 %v126
    %543 = vmatpush.msra.mxu0 %v125
    %544 = vmatpush.msra.mxu0 %v124
    %545 = vmatpush.msra.mxu0 %v123
    %546 = vmatpush.msra.mxu0 %v122
    %547 = vmatpush.msra.mxu0 %v121
    %548 = vmatpush.msra.mxu0 %v120
    %549 = vmatpush.msra.mxu0 %v119
    %550 = vmatpush.msra.mxu0 %v118
    %551 = vmatpush.msra.mxu0 %v117
    %552 = vmatpush.msra.mxu0 %v116
    %553 = vmatpush.msra.mxu0 %v115
    %554 = vmatmul.f32.gmra.mxu0 %v476
    %v555 = vpop.f32.mrf.mxu0
    %v556 = vadd.f32 0.0, %v555
    %557 = vmatmul.f32.gmra.mxu0 %v477
    %v558 = vpop.f32.mrf.mxu0
    %v559 = vadd.f32 0.0, %v558
    %560 = vmatmul.f32.gmra.mxu0 %v478
    %v561 = vpop.f32.mrf.mxu0
    %v562 = vadd.f32 0.0, %v561
    %563 = vmatmul.f32.gmra.mxu0 %v479
    %v564 = vpop.f32.mrf.mxu0
    %v565 = vadd.f32 0.0, %v564
    %566 = vdwg.mxu0
    %567 = vmatpush.msra.mxu0 %v113
    %568 = vmatpush.msra.mxu0 %v112
    %569 = vmatpush.msra.mxu0 %v111
    %570 = vmatpush.msra.mxu0 %v110
    %571 = vmatpush.msra.mxu0 %v109
    %572 = vmatpush.msra.mxu0 %v108
    %573 = vmatpush.msra.mxu0 %v107
    %574 = vmatpush.msra.mxu0 %v106
    %575 = vmatpush.msra.mxu0 %v105
    %576 = vmatpush.msra.mxu0 %v104
    %577 = vmatpush.msra.mxu0 %v103
    %578 = vmatpush.msra.mxu0 %v102
    %579 = vmatpush.msra.mxu0 %v101
    %580 = vmatpush.msra.mxu0 %v100
    %581 = vmatpush.msra.mxu0 %v99
    %582 = vmatpush.msra.mxu0 %v98
    %583 = vmatmul.f32.gmra.mxu0 %v498
    %v584 = vpop.f32.mrf.mxu0
    %v585 = vadd.f32 %v556, %v584
    %586 = vmatmul.f32.gmra.mxu0 %v501
    %v587 = vpop.f32.mrf.mxu0
    %v588 = vadd.f32 %v559, %v587
    %589 = vmatmul.f32.gmra.mxu0 %v504
    %v590 = vpop.f32.mrf.mxu0
    %v591 = vadd.f32 %v562, %v590
    %592 = vmatmul.f32.gmra.mxu0 %v507
    %v593 = vpop.f32.mrf.mxu0
    %v594 = vadd.f32 %v565, %v593
    %595 = vdwg.mxu0
    %596 = vmatpush.msra.mxu0 %v147
    %597 = vmatpush.msra.mxu0 %v146
    %598 = vmatpush.msra.mxu0 %v145
    %599 = vmatpush.msra.mxu0 %v144
    %600 = vmatpush.msra.mxu0 %v143
    %601 = vmatpush.msra.mxu0 %v142
    %602 = vmatpush.msra.mxu0 %v141
    %603 = vmatpush.msra.mxu0 %v140
    %604 = vmatpush.msra.mxu0 %v139
    %605 = vmatpush.msra.mxu0 %v138
    %606 = vmatpush.msra.mxu0 %v137
    %607 = vmatpush.msra.mxu0 %v136
    %608 = vmatpush.msra.mxu0 %v135
    %609 = vmatpush.msra.mxu0 %v134
    %610 = vmatpush.msra.mxu0 %v133
    %611 = vmatpush.msra.mxu0 %v132
    %612 = vmatmul.f32.gmra.mxu0 %v527
    %v613 = vpop.f32.mrf.mxu0
    %v614 = vadd.f32 0.0, %v613
    %615 = vmatmul.f32.gmra.mxu0 %v530
    %v616 = vpop.f32.mrf.mxu0
    %v617 = vadd.f32 0.0, %v616
    %618 = vmatmul.f32.gmra.mxu0 %v533
    %v619 = vpop.f32.mrf.mxu0
    %v620 = vadd.f32 0.0, %v619
    %621 = vmatmul.f32.gmra.mxu0 %v536
    %v622 = vpop.f32.mrf.mxu0
    %v623 = vadd.f32 0.0, %v622
    %624 = vdwg.mxu0
    %v625 = vadd.f32 %v585, %v614
    %v626 = vadd.f32 %v588, %v617
    %v627 = vadd.f32 %v591, %v620
    %v628 = vadd.f32 %v594, %v623
    %v629 = vmul.f32 %v174, 0.65
    %v630 = vmul.f32 %v175, 0.65
    %v631 = vmul.f32 %v176, 0.65
    %v632 = vmul.f32 %v177, 0.65
    %v633 = vsub.f32 %v629, %v178
    %v634 = vsub.f32 %v630, %v179
    %v635 = vsub.f32 %v631, %v180
    %v636 = vsub.f32 %v632, %v181
    %v638 = vperm.slane %v149, 0
    %v640 = vadd.f32 %v625, %v638
    %v641 = vadd.f32 %v626, %v638
    %v642 = vadd.f32 %v627, %v638
    %v643 = vadd.f32 %v628, %v638
    %v644 = vadd.f32 %v640, %v633
    %v645 = vadd.f32 %v641, %v634
    %v646 = vadd.f32 %v642, %v635
    %v647 = vadd.f32 %v643, %v636
    %vm648 = vcmp.gt.f32.partialorder %v644, 0.0
    %vm649 = vcmp.gt.f32.partialorder %v645, 0.0
    %vm650 = vcmp.gt.f32.partialorder %v646, 0.0
    %vm651 = vcmp.gt.f32.partialorder %v647, 0.0
    %v652 = vsel %vm648, 1, 0
    %v653 = vsel %vm649, 1, 0
    %v654 = vsel %vm650, 1, 0
    %v655 = vsel %vm651, 1, 0
    %v656 = vcvt.s32.f32 %v652
    %v657 = vcvt.s32.f32 %v653
    %v658 = vcvt.s32.f32 %v654
    %v659 = vcvt.s32.f32 %v655
    %660 = vst [vmem:[#allocation4] sm:$0xff] %v644
    %661 = vst [vmem:[#allocation4 + $0x8] sm:$0xff] %v645
    %662 = vst [vmem:[#allocation4 + $0x10] sm:$0xff] %v646
    %663 = vst [vmem:[#allocation4 + $0x18] sm:$0xff] %v647
    %s664 = scalar_lea.vmem %s0, 32
    %v665 = vld [vmem:[%s664] sm:$0xff]
    %v666 = vld [vmem:[%s664 + $0x8] sm:$0xff]
    %v667 = vld [vmem:[%s664 + $0x10] sm:$0xff]
    %v668 = vld [vmem:[%s664 + $0x18] sm:$0xff]
    %v669 = vmul.f32 %v194, 0.85
    %v670 = vmul.f32 %v195, 0.85
    %v671 = vmul.f32 %v196, 0.85
    %v672 = vmul.f32 %v197, 0.85
    %v673 = vmul.f32 %v665, 6.6666665
    %v674 = vmul.f32 %v666, 6.6666665
    %v675 = vmul.f32 %v667, 6.6666665
    %v676 = vmul.f32 %v668, 6.6666665
    %v677 = vadd.f32 %v669, %v673
    %v678 = vadd.f32 %v670, %v674
    %v679 = vadd.f32 %v671, %v675
    %v680 = vadd.f32 %v672, %v676
    %v681 = vmul.f32 %v206, 0.9
    %v682 = vmul.f32 %v207, 0.9
    %v683 = vmul.f32 %v208, 0.9
    %v684 = vmul.f32 %v209, 0.9
    %v685 = vmul.f32 %v194, 10.0
    %v686 = vmul.f32 %v195, 10.0
    %v687 = vmul.f32 %v196, 10.0
    %v688 = vmul.f32 %v197, 10.0
    %v689 = vadd.f32 %v681, %v685
    %v690 = vadd.f32 %v682, %v686
    %v691 = vadd.f32 %v683, %v687
    %v692 = vadd.f32 %v684, %v688
    %693 = vmatpush.msra.mxu0 0.0
    %694 = vmatpush.msra.mxu0 0.0
    %695 = vmatpush.msra.mxu0 0.0
    %696 = vmatpush.msra.mxu0 0.0
    %697 = vmatpush.msra.mxu0 0.0
    %698 = vmatpush.msra.mxu0 0.0
    %699 = vmatpush.msra.mxu0 0.0
    %700 = vmatpush.msra.mxu0 0.0
    %701 = vmatpush.msra.mxu0 0.0
    %702 = vmatpush.msra.mxu0 0.0
    %703 = vmatpush.msra.mxu0 0.0
    %704 = vmatpush.msra.mxu0 0.0
    %705 = vmatpush.msra.mxu0 %v692
    %706 = vmatpush.msra.mxu0 %v691
    %707 = vmatpush.msra.mxu0 %v690
    %708 = vmatpush.msra.mxu0 %v689
    %709 = vmatmul.f32.gmra.mxu0 %v212
    %v710 = vpop.f32.mrf.mxu0
    %v711 = vadd.f32 0.0, %v710
    %712 = vmatmul.f32.gmra.mxu0 %v215
    %v713 = vpop.f32.mrf.mxu0
    %v714 = vadd.f32 0.0, %v713
    %715 = vmatmul.f32.gmra.mxu0 %v218
    %v716 = vpop.f32.mrf.mxu0
    %v717 = vadd.f32 0.0, %v716
    %718 = vmatmul.f32.gmra.mxu0 %v221
    %v719 = vpop.f32.mrf.mxu0
    %v720 = vadd.f32 0.0, %v719
    %721 = vdwg.mxu0
    %722 = vmatpush.msra.mxu0 0.0
    %723 = vmatpush.msra.mxu0 0.0
    %724 = vmatpush.msra.mxu0 0.0
    %725 = vmatpush.msra.mxu0 0.0
    %726 = vmatpush.msra.mxu0 0.0
    %727 = vmatpush.msra.mxu0 0.0
    %728 = vmatpush.msra.mxu0 0.0
    %729 = vmatpush.msra.mxu0 0.0
    %730 = vmatpush.msra.mxu0 0.0
    %731 = vmatpush.msra.mxu0 0.0
    %732 = vmatpush.msra.mxu0 0.0
    %733 = vmatpush.msra.mxu0 0.0
    %734 = vmatpush.msra.mxu0 %v692
    %735 = vmatpush.msra.mxu0 %v691
    %736 = vmatpush.msra.mxu0 %v690
    %737 = vmatpush.msra.mxu0 %v689
    %738 = vmatmul.f32.gmra.mxu0 %v253
    %v739 = vpop.f32.mrf.mxu0
    %v740 = vadd.f32 0.0, %v739
    %741 = vmatmul.f32.gmra.mxu0 %v256
    %v742 = vpop.f32.mrf.mxu0
    %v743 = vadd.f32 0.0, %v742
    %744 = vmatmul.f32.gmra.mxu0 %v259
    %v745 = vpop.f32.mrf.mxu0
    %v746 = vadd.f32 0.0, %v745
    %747 = vmatmul.f32.gmra.mxu0 %v262
    %v748 = vpop.f32.mrf.mxu0
    %v749 = vadd.f32 0.0, %v748
    %750 = vdwg.mxu0
    %v752 = vsel %vm293, %v689, 0
    %v755 = vsel %vm293, %v690, 0
    %v758 = vsel %vm293, %v691, 0
    %v761 = vsel %vm293, %v692, 0
    %763 = vmatpush.msra.mxu0 0.0
    %764 = vmatpush.msra.mxu0 0.0
    %765 = vmatpush.msra.mxu0 0.0
    %766 = vmatpush.msra.mxu0 0.0
    %767 = vmatpush.msra.mxu0 0.0
    %768 = vmatpush.msra.mxu0 0.0
    %769 = vmatpush.msra.mxu0 0.0
    %770 = vmatpush.msra.mxu0 0.0
    %771 = vmatpush.msra.mxu0 %v88
    %772 = vmatpush.msra.mxu0 %v87
    %773 = vmatpush.msra.mxu0 %v86
    %774 = vmatpush.msra.mxu0 %v85
    %775 = vmatpush.msra.mxu0 %v84
    %776 = vmatpush.msra.mxu0 %v83
    %777 = vmatpush.msra.mxu0 %v82
    %778 = vmatpush.msra.mxu0 %v81
    %779 = vmatmul.f32.gmra.mxu0 %v752
    %v780 = vpop.f32.mrf.mxu0
    %v781 = vadd.f32 0.0, %v780
    %782 = vmatmul.f32.gmra.mxu0 %v755
    %v783 = vpop.f32.mrf.mxu0
    %v784 = vadd.f32 0.0, %v783
    %785 = vmatmul.f32.gmra.mxu0 %v758
    %v786 = vpop.f32.mrf.mxu0
    %v787 = vadd.f32 0.0, %v786
    %788 = vmatmul.f32.gmra.mxu0 %v761
    %v789 = vpop.f32.mrf.mxu0
    %v790 = vadd.f32 0.0, %v789
    %791 = vdwg.mxu0
    %v793 = vsel %vm293, %v711, 0
    %v796 = vsel %vm293, %v714, 0
    %v799 = vsel %vm293, %v717, 0
    %v802 = vsel %vm293, %v720, 0
    %804 = vmatpush.msra.mxu0 0.0
    %805 = vmatpush.msra.mxu0 0.0
    %806 = vmatpush.msra.mxu0 0.0
    %807 = vmatpush.msra.mxu0 0.0
    %808 = vmatpush.msra.mxu0 0.0
    %809 = vmatpush.msra.mxu0 0.0
    %810 = vmatpush.msra.mxu0 0.0
    %811 = vmatpush.msra.mxu0 0.0
    %812 = vmatpush.msra.mxu0 %v79
    %813 = vmatpush.msra.mxu0 %v78
    %814 = vmatpush.msra.mxu0 %v77
    %815 = vmatpush.msra.mxu0 %v76
    %816 = vmatpush.msra.mxu0 %v75
    %817 = vmatpush.msra.mxu0 %v74
    %818 = vmatpush.msra.mxu0 %v73
    %819 = vmatpush.msra.mxu0 %v72
    %820 = vmatmul.f32.gmra.mxu0 %v793
    %v821 = vpop.f32.mrf.mxu0
    %v822 = vadd.f32 %v781, %v821
    %823 = vmatmul.f32.gmra.mxu0 %v796
    %v824 = vpop.f32.mrf.mxu0
    %v825 = vadd.f32 %v784, %v824
    %826 = vmatmul.f32.gmra.mxu0 %v799
    %v827 = vpop.f32.mrf.mxu0
    %v828 = vadd.f32 %v787, %v827
    %829 = vmatmul.f32.gmra.mxu0 %v802
    %v830 = vpop.f32.mrf.mxu0
    %v831 = vadd.f32 %v790, %v830
    %832 = vdwg.mxu0
    %v834 = vsel %vm293, %v740, 0
    %v837 = vsel %vm293, %v743, 0
    %v840 = vsel %vm293, %v746, 0
    %v843 = vsel %vm293, %v749, 0
    %845 = vmatpush.msra.mxu0 0.0
    %846 = vmatpush.msra.mxu0 0.0
    %847 = vmatpush.msra.mxu0 0.0
    %848 = vmatpush.msra.mxu0 0.0
    %849 = vmatpush.msra.mxu0 0.0
    %850 = vmatpush.msra.mxu0 0.0
    %851 = vmatpush.msra.mxu0 0.0
    %852 = vmatpush.msra.mxu0 0.0
    %853 = vmatpush.msra.mxu0 %v97
    %854 = vmatpush.msra.mxu0 %v96
    %855 = vmatpush.msra.mxu0 %v95
    %856 = vmatpush.msra.mxu0 %v94
    %857 = vmatpush.msra.mxu0 %v93
    %858 = vmatpush.msra.mxu0 %v92
    %859 = vmatpush.msra.mxu0 %v91
    %860 = vmatpush.msra.mxu0 %v90
    %861 = vmatmul.f32.gmra.mxu0 %v834
    %v862 = vpop.f32.mrf.mxu0
    %v863 = vadd.f32 0.0, %v862
    %864 = vmatmul.f32.gmra.mxu0 %v837
    %v865 = vpop.f32.mrf.mxu0
    %v866 = vadd.f32 0.0, %v865
    %867 = vmatmul.f32.gmra.mxu0 %v840
    %v868 = vpop.f32.mrf.mxu0
    %v869 = vadd.f32 0.0, %v868
    %870 = vmatmul.f32.gmra.mxu0 %v843
    %v871 = vpop.f32.mrf.mxu0
    %v872 = vadd.f32 0.0, %v871
    %873 = vdwg.mxu0
    %v874 = vadd.f32 %v822, %v863
    %v875 = vadd.f32 %v825, %v866
    %v876 = vadd.f32 %v828, %v869
    %v877 = vadd.f32 %v831, %v872
    %v878 = vmul.f32 %v425, 0.65
    %v879 = vmul.f32 %v426, 0.65
    %v880 = vmul.f32 %v427, 0.65
    %v881 = vmul.f32 %v428, 0.65
    %v882 = vsub.f32 %v878, %v448
    %v883 = vsub.f32 %v879, %v449
    %v884 = vsub.f32 %v880, %v450
    %v885 = vsub.f32 %v881, %v451
    %v886 = vadd.f32 %v874, %v430
    %v887 = vadd.f32 %v875, %v430
    %v888 = vadd.f32 %v876, %v430
    %v889 = vadd.f32 %v877, %v430
    %v890 = vadd.f32 %v886, %v882
    %v891 = vadd.f32 %v887, %v883
    %v892 = vadd.f32 %v888, %v884
    %v893 = vadd.f32 %v889, %v885
    %vm894 = vcmp.gt.f32.partialorder %v890, 0.0
    %vm895 = vcmp.gt.f32.partialorder %v891, 0.0
    %vm896 = vcmp.gt.f32.partialorder %v892, 0.0
    %vm897 = vcmp.gt.f32.partialorder %v893, 0.0
    %v898 = vsel %vm894, 1, 0
    %v899 = vsel %vm895, 1, 0
    %v900 = vsel %vm896, 1, 0
    %v901 = vsel %vm897, 1, 0
    %v902 = vcvt.s32.f32 %v898
    %v903 = vcvt.s32.f32 %v899
    %v904 = vcvt.s32.f32 %v900
    %v905 = vcvt.s32.f32 %v901
    %s906 = scalar_lea.vmem [#allocation2], 32
    %907 = vst [vmem:[%s906] sm:$0xff] %v890
    %908 = vst [vmem:[%s906 + $0x8] sm:$0xff] %v891
    %909 = vst [vmem:[%s906 + $0x10] sm:$0xff] %v892
    %910 = vst [vmem:[%s906 + $0x18] sm:$0xff] %v893
    %v911 = vmul.f32 %v464, 0.85
    %v912 = vmul.f32 %v465, 0.85
    %v913 = vmul.f32 %v466, 0.85
    %v914 = vmul.f32 %v467, 0.85
    %v915 = vmul.f32 %v902, 6.6666665
    %v916 = vmul.f32 %v903, 6.6666665
    %v917 = vmul.f32 %v904, 6.6666665
    %v918 = vmul.f32 %v905, 6.6666665
    %v919 = vadd.f32 %v911, %v915
    %v920 = vadd.f32 %v912, %v916
    %v921 = vadd.f32 %v913, %v917
    %v922 = vadd.f32 %v914, %v918
    %v923 = vmul.f32 %v476, 0.9
    %v924 = vmul.f32 %v477, 0.9
    %v925 = vmul.f32 %v478, 0.9
    %v926 = vmul.f32 %v479, 0.9
    %v927 = vmul.f32 %v464, 10.0
    %v928 = vmul.f32 %v465, 10.0
    %v929 = vmul.f32 %v466, 10.0
    %v930 = vmul.f32 %v467, 10.0
    %v931 = vadd.f32 %v923, %v927
    %v932 = vadd.f32 %v924, %v928
    %v933 = vadd.f32 %v925, %v929
    %v934 = vadd.f32 %v926, %v930
    %935 = vmatpush.msra.mxu0 0.0
    %936 = vmatpush.msra.mxu0 0.0
    %937 = vmatpush.msra.mxu0 0.0
    %938 = vmatpush.msra.mxu0 0.0
    %939 = vmatpush.msra.mxu0 0.0
    %940 = vmatpush.msra.mxu0 0.0
    %941 = vmatpush.msra.mxu0 0.0
    %942 = vmatpush.msra.mxu0 0.0
    %943 = vmatpush.msra.mxu0 0.0
    %944 = vmatpush.msra.mxu0 0.0
    %945 = vmatpush.msra.mxu0 0.0
    %946 = vmatpush.msra.mxu0 0.0
    %947 = vmatpush.msra.mxu0 %v934
    %948 = vmatpush.msra.mxu0 %v933
    %949 = vmatpush.msra.mxu0 %v932
    %950 = vmatpush.msra.mxu0 %v931
    %951 = vmatmul.f32.gmra.mxu0 %v212
    %v952 = vpop.f32.mrf.mxu0
    %v953 = vadd.f32 0.0, %v952
    %954 = vmatmul.f32.gmra.mxu0 %v215
    %v955 = vpop.f32.mrf.mxu0
    %v956 = vadd.f32 0.0, %v955
    %957 = vmatmul.f32.gmra.mxu0 %v218
    %v958 = vpop.f32.mrf.mxu0
    %v959 = vadd.f32 0.0, %v958
    %960 = vmatmul.f32.gmra.mxu0 %v221
    %v961 = vpop.f32.mrf.mxu0
    %v962 = vadd.f32 0.0, %v961
    %963 = vdwg.mxu0
    %964 = vmatpush.msra.mxu0 0.0
    %965 = vmatpush.msra.mxu0 0.0
    %966 = vmatpush.msra.mxu0 0.0
    %967 = vmatpush.msra.mxu0 0.0
    %968 = vmatpush.msra.mxu0 0.0
    %969 = vmatpush.msra.mxu0 0.0
    %970 = vmatpush.msra.mxu0 0.0
    %971 = vmatpush.msra.mxu0 0.0
    %972 = vmatpush.msra.mxu0 0.0
    %973 = vmatpush.msra.mxu0 0.0
    %974 = vmatpush.msra.mxu0 0.0
    %975 = vmatpush.msra.mxu0 0.0
    %976 = vmatpush.msra.mxu0 %v934
    %977 = vmatpush.msra.mxu0 %v933
    %978 = vmatpush.msra.mxu0 %v932
    %979 = vmatpush.msra.mxu0 %v931
    %980 = vmatmul.f32.gmra.mxu0 %v253
    %v981 = vpop.f32.mrf.mxu0
    %v982 = vadd.f32 0.0, %v981
    %983 = vmatmul.f32.gmra.mxu0 %v256
    %v984 = vpop.f32.mrf.mxu0
    %v985 = vadd.f32 0.0, %v984
    %986 = vmatmul.f32.gmra.mxu0 %v259
    %v987 = vpop.f32.mrf.mxu0
    %v988 = vadd.f32 0.0, %v987
    %989 = vmatmul.f32.gmra.mxu0 %v262
    %v990 = vpop.f32.mrf.mxu0
    %v991 = vadd.f32 0.0, %v990
    %992 = vdwg.mxu0
    %993 = vmatpush.msra.mxu0 %v130
    %994 = vmatpush.msra.mxu0 %v129
    %995 = vmatpush.msra.mxu0 %v128
    %996 = vmatpush.msra.mxu0 %v127
    %997 = vmatpush.msra.mxu0 %v126
    %998 = vmatpush.msra.mxu0 %v125
    %999 = vmatpush.msra.mxu0 %v124
    %1000 = vmatpush.msra.mxu0 %v123
    %1001 = vmatpush.msra.mxu0 %v122
    %1002 = vmatpush.msra.mxu0 %v121
    %1003 = vmatpush.msra.mxu0 %v120
    %1004 = vmatpush.msra.mxu0 %v119
    %1005 = vmatpush.msra.mxu0 %v118
    %1006 = vmatpush.msra.mxu0 %v117
    %1007 = vmatpush.msra.mxu0 %v116
    %1008 = vmatpush.msra.mxu0 %v115
    %1009 = vmatmul.f32.gmra.mxu0 %v931
    %v1010 = vpop.f32.mrf.mxu0
    %v1011 = vadd.f32 0.0, %v1010
    %1012 = vmatmul.f32.gmra.mxu0 %v932
    %v1013 = vpop.f32.mrf.mxu0
    %v1014 = vadd.f32 0.0, %v1013
    %1015 = vmatmul.f32.gmra.mxu0 %v933
    %v1016 = vpop.f32.mrf.mxu0
    %v1017 = vadd.f32 0.0, %v1016
    %1018 = vmatmul.f32.gmra.mxu0 %v934
    %v1019 = vpop.f32.mrf.mxu0
    %v1020 = vadd.f32 0.0, %v1019
    %1021 = vdwg.mxu0
    %1022 = vmatpush.msra.mxu0 %v113
    %1023 = vmatpush.msra.mxu0 %v112
    %1024 = vmatpush.msra.mxu0 %v111
    %1025 = vmatpush.msra.mxu0 %v110
    %1026 = vmatpush.msra.mxu0 %v109
    %1027 = vmatpush.msra.mxu0 %v108
    %1028 = vmatpush.msra.mxu0 %v107
    %1029 = vmatpush.msra.mxu0 %v106
    %1030 = vmatpush.msra.mxu0 %v105
    %1031 = vmatpush.msra.mxu0 %v104
    %1032 = vmatpush.msra.mxu0 %v103
    %1033 = vmatpush.msra.mxu0 %v102
    %1034 = vmatpush.msra.mxu0 %v101
    %1035 = vmatpush.msra.mxu0 %v100
    %1036 = vmatpush.msra.mxu0 %v99
    %1037 = vmatpush.msra.mxu0 %v98
    %1038 = vmatmul.f32.gmra.mxu0 %v953
    %v1039 = vpop.f32.mrf.mxu0
    %v1040 = vadd.f32 %v1011, %v1039
    %1041 = vmatmul.f32.gmra.mxu0 %v956
    %v1042 = vpop.f32.mrf.mxu0
    %v1043 = vadd.f32 %v1014, %v1042
    %1044 = vmatmul.f32.gmra.mxu0 %v959
    %v1045 = vpop.f32.mrf.mxu0
    %v1046 = vadd.f32 %v1017, %v1045
    %1047 = vmatmul.f32.gmra.mxu0 %v962
    %v1048 = vpop.f32.mrf.mxu0
    %v1049 = vadd.f32 %v1020, %v1048
    %1050 = vdwg.mxu0
    %1051 = vmatpush.msra.mxu0 %v147
    %1052 = vmatpush.msra.mxu0 %v146
    %1053 = vmatpush.msra.mxu0 %v145
    %1054 = vmatpush.msra.mxu0 %v144
    %1055 = vmatpush.msra.mxu0 %v143
    %1056 = vmatpush.msra.mxu0 %v142
    %1057 = vmatpush.msra.mxu0 %v141
    %1058 = vmatpush.msra.mxu0 %v140
    %1059 = vmatpush.msra.mxu0 %v139
    %1060 = vmatpush.msra.mxu0 %v138
    %1061 = vmatpush.msra.mxu0 %v137
    %1062 = vmatpush.msra.mxu0 %v136
    %1063 = vmatpush.msra.mxu0 %v135
    %1064 = vmatpush.msra.mxu0 %v134
    %1065 = vmatpush.msra.mxu0 %v133
    %1066 = vmatpush.msra.mxu0 %v132
    %1067 = vmatmul.f32.gmra.mxu0 %v982
    %v1068 = vpop.f32.mrf.mxu0
    %v1069 = vadd.f32 0.0, %v1068
    %1070 = vmatmul.f32.gmra.mxu0 %v985
    %v1071 = vpop.f32.mrf.mxu0
    %v1072 = vadd.f32 0.0, %v1071
    %1073 = vmatmul.f32.gmra.mxu0 %v988
    %v1074 = vpop.f32.mrf.mxu0
    %v1075 = vadd.f32 0.0, %v1074
    %1076 = vmatmul.f32.gmra.mxu0 %v991
    %v1077 = vpop.f32.mrf.mxu0
    %v1078 = vadd.f32 0.0, %v1077
    %1079 = vdwg.mxu0
    %v1080 = vadd.f32 %v1040, %v1069
    %v1081 = vadd.f32 %v1043, %v1072
    %v1082 = vadd.f32 %v1046, %v1075
    %v1083 = vadd.f32 %v1049, %v1078
    %v1084 = vmul.f32 %v633, 0.65
    %v1085 = vmul.f32 %v634, 0.65
    %v1086 = vmul.f32 %v635, 0.65
    %v1087 = vmul.f32 %v636, 0.65
    %v1088 = vsub.f32 %v1084, %v656
    %v1089 = vsub.f32 %v1085, %v657
    %v1090 = vsub.f32 %v1086, %v658
    %v1091 = vsub.f32 %v1087, %v659
    %v1092 = vadd.f32 %v1080, %v638
    %v1093 = vadd.f32 %v1081, %v638
    %v1094 = vadd.f32 %v1082, %v638
    %v1095 = vadd.f32 %v1083, %v638
    %v1096 = vadd.f32 %v1092, %v1088
    %v1097 = vadd.f32 %v1093, %v1089
    %v1098 = vadd.f32 %v1094, %v1090
    %v1099 = vadd.f32 %v1095, %v1091
    %vm1100 = vcmp.gt.f32.partialorder %v1096, 0.0
    %vm1101 = vcmp.gt.f32.partialorder %v1097, 0.0
    %vm1102 = vcmp.gt.f32.partialorder %v1098, 0.0
    %vm1103 = vcmp.gt.f32.partialorder %v1099, 0.0
    %v1104 = vsel %vm1100, 1, 0
    %v1105 = vsel %vm1101, 1, 0
    %v1106 = vsel %vm1102, 1, 0
    %v1107 = vsel %vm1103, 1, 0
    %v1108 = vcvt.s32.f32 %v1104
    %v1109 = vcvt.s32.f32 %v1105
    %v1110 = vcvt.s32.f32 %v1106
    %v1111 = vcvt.s32.f32 %v1107
    %s1112 = scalar_lea.vmem [#allocation4], 32
    %1113 = vst [vmem:[%s1112] sm:$0xff] %v1096
    %1114 = vst [vmem:[%s1112 + $0x8] sm:$0xff] %v1097
    %1115 = vst [vmem:[%s1112 + $0x10] sm:$0xff] %v1098
    %1116 = vst [vmem:[%s1112 + $0x18] sm:$0xff] %v1099
    %s1117 = scalar_lea.vmem %s0, 64
    %v1118 = vld [vmem:[%s1117] sm:$0xff]
    %v1119 = vld [vmem:[%s1117 + $0x8] sm:$0xff]
    %v1120 = vld [vmem:[%s1117 + $0x10] sm:$0xff]
    %v1121 = vld [vmem:[%s1117 + $0x18] sm:$0xff]
    %v1122 = vmul.f32 %v677, 0.85
    %v1123 = vmul.f32 %v678, 0.85
    %v1124 = vmul.f32 %v679, 0.85
    %v1125 = vmul.f32 %v680, 0.85
    %v1126 = vmul.f32 %v1118, 6.6666665
    %v1127 = vmul.f32 %v1119, 6.6666665
    %v1128 = vmul.f32 %v1120, 6.6666665
    %v1129 = vmul.f32 %v1121, 6.6666665
    %v1130 = vadd.f32 %v1122, %v1126
    %v1131 = vadd.f32 %v1123, %v1127
    %v1132 = vadd.f32 %v1124, %v1128
    %v1133 = vadd.f32 %v1125, %v1129
    %v1134 = vmul.f32 %v689, 0.9
    %v1135 = vmul.f32 %v690, 0.9
    %v1136 = vmul.f32 %v691, 0.9
    %v1137 = vmul.f32 %v692, 0.9
    %v1138 = vmul.f32 %v677, 10.0
    %v1139 = vmul.f32 %v678, 10.0
    %v1140 = vmul.f32 %v679, 10.0
    %v1141 = vmul.f32 %v680, 10.0
    %v1142 = vadd.f32 %v1134, %v1138
    %v1143 = vadd.f32 %v1135, %v1139
    %v1144 = vadd.f32 %v1136, %v1140
    %v1145 = vadd.f32 %v1137, %v1141
    %1146 = vmatpush.msra.mxu0 0.0
    %1147 = vmatpush.msra.mxu0 0.0
    %1148 = vmatpush.msra.mxu0 0.0
    %1149 = vmatpush.msra.mxu0 0.0
    %1150 = vmatpush.msra.mxu0 0.0
    %1151 = vmatpush.msra.mxu0 0.0
    %1152 = vmatpush.msra.mxu0 0.0
    %1153 = vmatpush.msra.mxu0 0.0
    %1154 = vmatpush.msra.mxu0 0.0
    %1155 = vmatpush.msra.mxu0 0.0
    %1156 = vmatpush.msra.mxu0 0.0
    %1157 = vmatpush.msra.mxu0 0.0
    %1158 = vmatpush.msra.mxu0 %v1145
    %1159 = vmatpush.msra.mxu0 %v1144
    %1160 = vmatpush.msra.mxu0 %v1143
    %1161 = vmatpush.msra.mxu0 %v1142
    %1162 = vmatmul.f32.gmra.mxu0 %v212
    %v1163 = vpop.f32.mrf.mxu0
    %v1164 = vadd.f32 0.0, %v1163
    %1165 = vmatmul.f32.gmra.mxu0 %v215
    %v1166 = vpop.f32.mrf.mxu0
    %v1167 = vadd.f32 0.0, %v1166
    %1168 = vmatmul.f32.gmra.mxu0 %v218
    %v1169 = vpop.f32.mrf.mxu0
    %v1170 = vadd.f32 0.0, %v1169
    %1171 = vmatmul.f32.gmra.mxu0 %v221
    %v1172 = vpop.f32.mrf.mxu0
    %v1173 = vadd.f32 0.0, %v1172
    %1174 = vdwg.mxu0
    %1175 = vmatpush.msra.mxu0 0.0
    %1176 = vmatpush.msra.mxu0 0.0
    %1177 = vmatpush.msra.mxu0 0.0
    %1178 = vmatpush.msra.mxu0 0.0
    %1179 = vmatpush.msra.mxu0 0.0
    %1180 = vmatpush.msra.mxu0 0.0
    %1181 = vmatpush.msra.mxu0 0.0
    %1182 = vmatpush.msra.mxu0 0.0
    %1183 = vmatpush.msra.mxu0 0.0
    %1184 = vmatpush.msra.mxu0 0.0
    %1185 = vmatpush.msra.mxu0 0.0
    %1186 = vmatpush.msra.mxu0 0.0
    %1187 = vmatpush.msra.mxu0 %v1145
    %1188 = vmatpush.msra.mxu0 %v1144
    %1189 = vmatpush.msra.mxu0 %v1143
    %1190 = vmatpush.msra.mxu0 %v1142
    %1191 = vmatmul.f32.gmra.mxu0 %v253
    %v1192 = vpop.f32.mrf.mxu0
    %v1193 = vadd.f32 0.0, %v1192
    %1194 = vmatmul.f32.gmra.mxu0 %v256
    %v1195 = vpop.f32.mrf.mxu0
    %v1196 = vadd.f32 0.0, %v1195
    %1197 = vmatmul.f32.gmra.mxu0 %v259
    %v1198 = vpop.f32.mrf.mxu0
    %v1199 = vadd.f32 0.0, %v1198
    %1200 = vmatmul.f32.gmra.mxu0 %v262
    %v1201 = vpop.f32.mrf.mxu0
    %v1202 = vadd.f32 0.0, %v1201
    %1203 = vdwg.mxu0
    %v1205 = vsel %vm293, %v1142, 0
    %v1208 = vsel %vm293, %v1143, 0
    %v1211 = vsel %vm293, %v1144, 0
    %v1214 = vsel %vm293, %v1145, 0
    %1216 = vmatpush.msra.mxu0 0.0
    %1217 = vmatpush.msra.mxu0 0.0
    %1218 = vmatpush.msra.mxu0 0.0
    %1219 = vmatpush.msra.mxu0 0.0
    %1220 = vmatpush.msra.mxu0 0.0
    %1221 = vmatpush.msra.mxu0 0.0
    %1222 = vmatpush.msra.mxu0 0.0
    %1223 = vmatpush.msra.mxu0 0.0
    %1224 = vmatpush.msra.mxu0 %v88
    %1225 = vmatpush.msra.mxu0 %v87
    %1226 = vmatpush.msra.mxu0 %v86
    %1227 = vmatpush.msra.mxu0 %v85
    %1228 = vmatpush.msra.mxu0 %v84
    %1229 = vmatpush.msra.mxu0 %v83
    %1230 = vmatpush.msra.mxu0 %v82
    %1231 = vmatpush.msra.mxu0 %v81
    %1232 = vmatmul.f32.gmra.mxu0 %v1205
    %v1233 = vpop.f32.mrf.mxu0
    %v1234 = vadd.f32 0.0, %v1233
    %1235 = vmatmul.f32.gmra.mxu0 %v1208
    %v1236 = vpop.f32.mrf.mxu0
    %v1237 = vadd.f32 0.0, %v1236
    %1238 = vmatmul.f32.gmra.mxu0 %v1211
    %v1239 = vpop.f32.mrf.mxu0
    %v1240 = vadd.f32 0.0, %v1239
    %1241 = vmatmul.f32.gmra.mxu0 %v1214
    %v1242 = vpop.f32.mrf.mxu0
    %v1243 = vadd.f32 0.0, %v1242
    %1244 = vdwg.mxu0
    %v1246 = vsel %vm293, %v1164, 0
    %v1249 = vsel %vm293, %v1167, 0
    %v1252 = vsel %vm293, %v1170, 0
    %v1255 = vsel %vm293, %v1173, 0
    %1257 = vmatpush.msra.mxu0 0.0
    %1258 = vmatpush.msra.mxu0 0.0
    %1259 = vmatpush.msra.mxu0 0.0
    %1260 = vmatpush.msra.mxu0 0.0
    %1261 = vmatpush.msra.mxu0 0.0
    %1262 = vmatpush.msra.mxu0 0.0
    %1263 = vmatpush.msra.mxu0 0.0
    %1264 = vmatpush.msra.mxu0 0.0
    %1265 = vmatpush.msra.mxu0 %v79
    %1266 = vmatpush.msra.mxu0 %v78
    %1267 = vmatpush.msra.mxu0 %v77
    %1268 = vmatpush.msra.mxu0 %v76
    %1269 = vmatpush.msra.mxu0 %v75
    %1270 = vmatpush.msra.mxu0 %v74
    %1271 = vmatpush.msra.mxu0 %v73
    %1272 = vmatpush.msra.mxu0 %v72
    %1273 = vmatmul.f32.gmra.mxu0 %v1246
    %v1274 = vpop.f32.mrf.mxu0
    %v1275 = vadd.f32 %v1234, %v1274
    %1276 = vmatmul.f32.gmra.mxu0 %v1249
    %v1277 = vpop.f32.mrf.mxu0
    %v1278 = vadd.f32 %v1237, %v1277
    %1279 = vmatmul.f32.gmra.mxu0 %v1252
    %v1280 = vpop.f32.mrf.mxu0
    %v1281 = vadd.f32 %v1240, %v1280
    %1282 = vmatmul.f32.gmra.mxu0 %v1255
    %v1283 = vpop.f32.mrf.mxu0
    %v1284 = vadd.f32 %v1243, %v1283
    %1285 = vdwg.mxu0
    %v1287 = vsel %vm293, %v1193, 0
    %v1290 = vsel %vm293, %v1196, 0
    %v1293 = vsel %vm293, %v1199, 0
    %v1296 = vsel %vm293, %v1202, 0
    %1298 = vmatpush.msra.mxu0 0.0
    %1299 = vmatpush.msra.mxu0 0.0
    %1300 = vmatpush.msra.mxu0 0.0
    %1301 = vmatpush.msra.mxu0 0.0
    %1302 = vmatpush.msra.mxu0 0.0
    %1303 = vmatpush.msra.mxu0 0.0
    %1304 = vmatpush.msra.mxu0 0.0
    %1305 = vmatpush.msra.mxu0 0.0
    %1306 = vmatpush.msra.mxu0 %v97
    %1307 = vmatpush.msra.mxu0 %v96
    %1308 = vmatpush.msra.mxu0 %v95
    %1309 = vmatpush.msra.mxu0 %v94
    %1310 = vmatpush.msra.mxu0 %v93
    %1311 = vmatpush.msra.mxu0 %v92
    %1312 = vmatpush.msra.mxu0 %v91
    %1313 = vmatpush.msra.mxu0 %v90
    %1314 = vmatmul.f32.gmra.mxu0 %v1287
    %v1315 = vpop.f32.mrf.mxu0
    %v1316 = vadd.f32 0.0, %v1315
    %1317 = vmatmul.f32.gmra.mxu0 %v1290
    %v1318 = vpop.f32.mrf.mxu0
    %v1319 = vadd.f32 0.0, %v1318
    %1320 = vmatmul.f32.gmra.mxu0 %v1293
    %v1321 = vpop.f32.mrf.mxu0
    %v1322 = vadd.f32 0.0, %v1321
    %1323 = vmatmul.f32.gmra.mxu0 %v1296
    %v1324 = vpop.f32.mrf.mxu0
    %v1325 = vadd.f32 0.0, %v1324
    %1326 = vdwg.mxu0
    %v1327 = vadd.f32 %v1275, %v1316
    %v1328 = vadd.f32 %v1278, %v1319
    %v1329 = vadd.f32 %v1281, %v1322
    %v1330 = vadd.f32 %v1284, %v1325
    %v1331 = vmul.f32 %v882, 0.65
    %v1332 = vmul.f32 %v883, 0.65
    %v1333 = vmul.f32 %v884, 0.65
    %v1334 = vmul.f32 %v885, 0.65
    %v1335 = vsub.f32 %v1331, %v902
    %v1336 = vsub.f32 %v1332, %v903
    %v1337 = vsub.f32 %v1333, %v904
    %v1338 = vsub.f32 %v1334, %v905
    %v1339 = vadd.f32 %v1327, %v430
    %v1340 = vadd.f32 %v1328, %v430
    %v1341 = vadd.f32 %v1329, %v430
    %v1342 = vadd.f32 %v1330, %v430
    %v1343 = vadd.f32 %v1339, %v1335
    %v1344 = vadd.f32 %v1340, %v1336
    %v1345 = vadd.f32 %v1341, %v1337
    %v1346 = vadd.f32 %v1342, %v1338
    %vm1347 = vcmp.gt.f32.partialorder %v1343, 0.0
    %vm1348 = vcmp.gt.f32.partialorder %v1344, 0.0
    %vm1349 = vcmp.gt.f32.partialorder %v1345, 0.0
    %vm1350 = vcmp.gt.f32.partialorder %v1346, 0.0
    %v1351 = vsel %vm1347, 1, 0
    %v1352 = vsel %vm1348, 1, 0
    %v1353 = vsel %vm1349, 1, 0
    %v1354 = vsel %vm1350, 1, 0
    %v1355 = vcvt.s32.f32 %v1351
    %v1356 = vcvt.s32.f32 %v1352
    %v1357 = vcvt.s32.f32 %v1353
    %v1358 = vcvt.s32.f32 %v1354
    %s1359 = scalar_lea.vmem [#allocation2], 64
    %1360 = vst [vmem:[%s1359] sm:$0xff] %v1343
    %1361 = vst [vmem:[%s1359 + $0x8] sm:$0xff] %v1344
    %1362 = vst [vmem:[%s1359 + $0x10] sm:$0xff] %v1345
    %1363 = vst [vmem:[%s1359 + $0x18] sm:$0xff] %v1346
    %v1364 = vmul.f32 %v919, 0.85
    %v1365 = vmul.f32 %v920, 0.85
    %v1366 = vmul.f32 %v921, 0.85
    %v1367 = vmul.f32 %v922, 0.85
    %v1368 = vmul.f32 %v1355, 6.6666665
    %v1369 = vmul.f32 %v1356, 6.6666665
    %v1370 = vmul.f32 %v1357, 6.6666665
    %v1371 = vmul.f32 %v1358, 6.6666665
    %v1372 = vadd.f32 %v1364, %v1368
    %v1373 = vadd.f32 %v1365, %v1369
    %v1374 = vadd.f32 %v1366, %v1370
    %v1375 = vadd.f32 %v1367, %v1371
    %v1376 = vmul.f32 %v931, 0.9
    %v1377 = vmul.f32 %v932, 0.9
    %v1378 = vmul.f32 %v933, 0.9
    %v1379 = vmul.f32 %v934, 0.9
    %v1380 = vmul.f32 %v919, 10.0
    %v1381 = vmul.f32 %v920, 10.0
    %v1382 = vmul.f32 %v921, 10.0
    %v1383 = vmul.f32 %v922, 10.0
    %v1384 = vadd.f32 %v1376, %v1380
    %v1385 = vadd.f32 %v1377, %v1381
    %v1386 = vadd.f32 %v1378, %v1382
    %v1387 = vadd.f32 %v1379, %v1383
    %1388 = vmatpush.msra.mxu0 0.0
    %1389 = vmatpush.msra.mxu0 0.0
    %1390 = vmatpush.msra.mxu0 0.0
    %1391 = vmatpush.msra.mxu0 0.0
    %1392 = vmatpush.msra.mxu0 0.0
    %1393 = vmatpush.msra.mxu0 0.0
    %1394 = vmatpush.msra.mxu0 0.0
    %1395 = vmatpush.msra.mxu0 0.0
    %1396 = vmatpush.msra.mxu0 0.0
    %1397 = vmatpush.msra.mxu0 0.0
    %1398 = vmatpush.msra.mxu0 0.0
    %1399 = vmatpush.msra.mxu0 0.0
    %1400 = vmatpush.msra.mxu0 %v1387
    %1401 = vmatpush.msra.mxu0 %v1386
    %1402 = vmatpush.msra.mxu0 %v1385
    %1403 = vmatpush.msra.mxu0 %v1384
    %1404 = vmatmul.f32.gmra.mxu0 %v212
    %v1405 = vpop.f32.mrf.mxu0
    %v1406 = vadd.f32 0.0, %v1405
    %1407 = vmatmul.f32.gmra.mxu0 %v215
    %v1408 = vpop.f32.mrf.mxu0
    %v1409 = vadd.f32 0.0, %v1408
    %1410 = vmatmul.f32.gmra.mxu0 %v218
    %v1411 = vpop.f32.mrf.mxu0
    %v1412 = vadd.f32 0.0, %v1411
    %1413 = vmatmul.f32.gmra.mxu0 %v221
    %v1414 = vpop.f32.mrf.mxu0
    %v1415 = vadd.f32 0.0, %v1414
    %1416 = vdwg.mxu0
    %1417 = vmatpush.msra.mxu0 0.0
    %1418 = vmatpush.msra.mxu0 0.0
    %1419 = vmatpush.msra.mxu0 0.0
    %1420 = vmatpush.msra.mxu0 0.0
    %1421 = vmatpush.msra.mxu0 0.0
    %1422 = vmatpush.msra.mxu0 0.0
    %1423 = vmatpush.msra.mxu0 0.0
    %1424 = vmatpush.msra.mxu0 0.0
    %1425 = vmatpush.msra.mxu0 0.0
    %1426 = vmatpush.msra.mxu0 0.0
    %1427 = vmatpush.msra.mxu0 0.0
    %1428 = vmatpush.msra.mxu0 0.0
    %1429 = vmatpush.msra.mxu0 %v1387
    %1430 = vmatpush.msra.mxu0 %v1386
    %1431 = vmatpush.msra.mxu0 %v1385
    %1432 = vmatpush.msra.mxu0 %v1384
    %1433 = vmatmul.f32.gmra.mxu0 %v253
    %v1434 = vpop.f32.mrf.mxu0
    %v1435 = vadd.f32 0.0, %v1434
    %1436 = vmatmul.f32.gmra.mxu0 %v256
    %v1437 = vpop.f32.mrf.mxu0
    %v1438 = vadd.f32 0.0, %v1437
    %1439 = vmatmul.f32.gmra.mxu0 %v259
    %v1440 = vpop.f32.mrf.mxu0
    %v1441 = vadd.f32 0.0, %v1440
    %1442 = vmatmul.f32.gmra.mxu0 %v262
    %v1443 = vpop.f32.mrf.mxu0
    %v1444 = vadd.f32 0.0, %v1443
    %1445 = vdwg.mxu0
    %1446 = vmatpush.msra.mxu0 %v130
    %1447 = vmatpush.msra.mxu0 %v129
    %1448 = vmatpush.msra.mxu0 %v128
    %1449 = vmatpush.msra.mxu0 %v127
    %1450 = vmatpush.msra.mxu0 %v126
    %1451 = vmatpush.msra.mxu0 %v125
    %1452 = vmatpush.msra.mxu0 %v124
    %1453 = vmatpush.msra.mxu0 %v123
    %1454 = vmatpush.msra.mxu0 %v122
    %1455 = vmatpush.msra.mxu0 %v121
    %1456 = vmatpush.msra.mxu0 %v120
    %1457 = vmatpush.msra.mxu0 %v119
    %1458 = vmatpush.msra.mxu0 %v118
    %1459 = vmatpush.msra.mxu0 %v117
    %1460 = vmatpush.msra.mxu0 %v116
    %1461 = vmatpush.msra.mxu0 %v115
    %1462 = vmatmul.f32.gmra.mxu0 %v1384
    %v1463 = vpop.f32.mrf.mxu0
    %v1464 = vadd.f32 0.0, %v1463
    %1465 = vmatmul.f32.gmra.mxu0 %v1385
    %v1466 = vpop.f32.mrf.mxu0
    %v1467 = vadd.f32 0.0, %v1466
    %1468 = vmatmul.f32.gmra.mxu0 %v1386
    %v1469 = vpop.f32.mrf.mxu0
    %v1470 = vadd.f32 0.0, %v1469
    %1471 = vmatmul.f32.gmra.mxu0 %v1387
    %v1472 = vpop.f32.mrf.mxu0
    %v1473 = vadd.f32 0.0, %v1472
    %1474 = vdwg.mxu0
    %1475 = vmatpush.msra.mxu0 %v113
    %1476 = vmatpush.msra.mxu0 %v112
    %1477 = vmatpush.msra.mxu0 %v111
    %1478 = vmatpush.msra.mxu0 %v110
    %1479 = vmatpush.msra.mxu0 %v109
    %1480 = vmatpush.msra.mxu0 %v108
    %1481 = vmatpush.msra.mxu0 %v107
    %1482 = vmatpush.msra.mxu0 %v106
    %1483 = vmatpush.msra.mxu0 %v105
    %1484 = vmatpush.msra.mxu0 %v104
    %1485 = vmatpush.msra.mxu0 %v103
    %1486 = vmatpush.msra.mxu0 %v102
    %1487 = vmatpush.msra.mxu0 %v101
    %1488 = vmatpush.msra.mxu0 %v100
    %1489 = vmatpush.msra.mxu0 %v99
    %1490 = vmatpush.msra.mxu0 %v98
    %1491 = vmatmul.f32.gmra.mxu0 %v1406
    %v1492 = vpop.f32.mrf.mxu0
    %v1493 = vadd.f32 %v1464, %v1492
    %1494 = vmatmul.f32.gmra.mxu0 %v1409
    %v1495 = vpop.f32.mrf.mxu0
    %v1496 = vadd.f32 %v1467, %v1495
    %1497 = vmatmul.f32.gmra.mxu0 %v1412
    %v1498 = vpop.f32.mrf.mxu0
    %v1499 = vadd.f32 %v1470, %v1498
    %1500 = vmatmul.f32.gmra.mxu0 %v1415
    %v1501 = vpop.f32.mrf.mxu0
    %v1502 = vadd.f32 %v1473, %v1501
    %1503 = vdwg.mxu0
    %1504 = vmatpush.msra.mxu0 %v147
    %1505 = vmatpush.msra.mxu0 %v146
    %1506 = vmatpush.msra.mxu0 %v145
    %1507 = vmatpush.msra.mxu0 %v144
    %1508 = vmatpush.msra.mxu0 %v143
    %1509 = vmatpush.msra.mxu0 %v142
    %1510 = vmatpush.msra.mxu0 %v141
    %1511 = vmatpush.msra.mxu0 %v140
    %1512 = vmatpush.msra.mxu0 %v139
    %1513 = vmatpush.msra.mxu0 %v138
    %1514 = vmatpush.msra.mxu0 %v137
    %1515 = vmatpush.msra.mxu0 %v136
    %1516 = vmatpush.msra.mxu0 %v135
    %1517 = vmatpush.msra.mxu0 %v134
    %1518 = vmatpush.msra.mxu0 %v133
    %1519 = vmatpush.msra.mxu0 %v132
    %1520 = vmatmul.f32.gmra.mxu0 %v1435
    %v1521 = vpop.f32.mrf.mxu0
    %v1522 = vadd.f32 0.0, %v1521
    %1523 = vmatmul.f32.gmra.mxu0 %v1438
    %v1524 = vpop.f32.mrf.mxu0
    %v1525 = vadd.f32 0.0, %v1524
    %1526 = vmatmul.f32.gmra.mxu0 %v1441
    %v1527 = vpop.f32.mrf.mxu0
    %v1528 = vadd.f32 0.0, %v1527
    %1529 = vmatmul.f32.gmra.mxu0 %v1444
    %v1530 = vpop.f32.mrf.mxu0
    %v1531 = vadd.f32 0.0, %v1530
    %1532 = vdwg.mxu0
    %v1533 = vadd.f32 %v1493, %v1522
    %v1534 = vadd.f32 %v1496, %v1525
    %v1535 = vadd.f32 %v1499, %v1528
    %v1536 = vadd.f32 %v1502, %v1531
    %v1537 = vmul.f32 %v1088, 0.65
    %v1538 = vmul.f32 %v1089, 0.65
    %v1539 = vmul.f32 %v1090, 0.65
    %v1540 = vmul.f32 %v1091, 0.65
    %v1541 = vsub.f32 %v1537, %v1108
    %v1542 = vsub.f32 %v1538, %v1109
    %v1543 = vsub.f32 %v1539, %v1110
    %v1544 = vsub.f32 %v1540, %v1111
    %v1545 = vadd.f32 %v1533, %v638
    %v1546 = vadd.f32 %v1534, %v638
    %v1547 = vadd.f32 %v1535, %v638
    %v1548 = vadd.f32 %v1536, %v638
    %v1549 = vadd.f32 %v1545, %v1541
    %v1550 = vadd.f32 %v1546, %v1542
    %v1551 = vadd.f32 %v1547, %v1543
    %v1552 = vadd.f32 %v1548, %v1544
    %vm1553 = vcmp.gt.f32.partialorder %v1549, 0.0
    %vm1554 = vcmp.gt.f32.partialorder %v1550, 0.0
    %vm1555 = vcmp.gt.f32.partialorder %v1551, 0.0
    %vm1556 = vcmp.gt.f32.partialorder %v1552, 0.0
    %v1557 = vsel %vm1553, 1, 0
    %v1558 = vsel %vm1554, 1, 0
    %v1559 = vsel %vm1555, 1, 0
    %v1560 = vsel %vm1556, 1, 0
    %v1561 = vcvt.s32.f32 %v1557
    %v1562 = vcvt.s32.f32 %v1558
    %v1563 = vcvt.s32.f32 %v1559
    %v1564 = vcvt.s32.f32 %v1560
    %s1565 = scalar_lea.vmem [#allocation4], 64
    %1566 = vst [vmem:[%s1565] sm:$0xff] %v1549
    %1567 = vst [vmem:[%s1565 + $0x8] sm:$0xff] %v1550
    %1568 = vst [vmem:[%s1565 + $0x10] sm:$0xff] %v1551
    %1569 = vst [vmem:[%s1565 + $0x18] sm:$0xff] %v1552
    %1570 = vst.msk [vmem:[#allocation6] sm:$0xff] %vm293, %v1130
    %1571 = vst.msk [vmem:[#allocation6 + $0x8] sm:$0xff] %vm293, %v1131
    %1572 = vst.msk [vmem:[#allocation6 + $0x10] sm:$0xff] %vm293, %v1132
    %1573 = vst.msk [vmem:[#allocation6 + $0x18] sm:$0xff] %vm293, %v1133
    %1574 = vst.msk [vmem:[#allocation7] sm:$0xff] %vm293, %v1142
    %1575 = vst.msk [vmem:[#allocation7 + $0x8] sm:$0xff] %vm293, %v1143
    %1576 = vst.msk [vmem:[#allocation7 + $0x10] sm:$0xff] %vm293, %v1144
    %1577 = vst.msk [vmem:[#allocation7 + $0x18] sm:$0xff] %vm293, %v1145
    %1578 = vst [vmem:[#allocation9] sm:$0xff] %v1335
    %1579 = vst [vmem:[#allocation9 + $0x8] sm:$0xff] %v1336
    %1580 = vst [vmem:[#allocation9 + $0x10] sm:$0xff] %v1337
    %1581 = vst [vmem:[#allocation9 + $0x18] sm:$0xff] %v1338
    %1582 = vst [vmem:[#allocation10] sm:$0xff] %v1355
    %1583 = vst [vmem:[#allocation10 + $0x8] sm:$0xff] %v1356
    %1584 = vst [vmem:[#allocation10 + $0x10] sm:$0xff] %v1357
    %1585 = vst [vmem:[#allocation10 + $0x18] sm:$0xff] %v1358
    %1586 = vst [vmem:[#allocation12] sm:$0xff] %v1372
    %1587 = vst [vmem:[#allocation12 + $0x8] sm:$0xff] %v1373
    %1588 = vst [vmem:[#allocation12 + $0x10] sm:$0xff] %v1374
    %1589 = vst [vmem:[#allocation12 + $0x18] sm:$0xff] %v1375
    %1590 = vst [vmem:[#allocation13] sm:$0xff] %v1384
    %1591 = vst [vmem:[#allocation13 + $0x8] sm:$0xff] %v1385
    %1592 = vst [vmem:[#allocation13 + $0x10] sm:$0xff] %v1386
    %1593 = vst [vmem:[#allocation13 + $0x18] sm:$0xff] %v1387
    %1594 = vst [vmem:[#allocation15] sm:$0xff] %v1541
    %1595 = vst [vmem:[#allocation15 + $0x8] sm:$0xff] %v1542
    %1596 = vst [vmem:[#allocation15 + $0x10] sm:$0xff] %v1543
    %1597 = vst [vmem:[#allocation15 + $0x18] sm:$0xff] %v1544
    %1598 = vst [vmem:[#allocation16] sm:$0xff] %v1561
    %1599 = vst [vmem:[#allocation16 + $0x8] sm:$0xff] %v1562
    %1600 = vst [vmem:[#allocation16 + $0x10] sm:$0xff] %v1563
    %1601 = vst [vmem:[#allocation16 + $0x18] sm:$0xff] %v1564
    // Predicated region
    $region58: #{_burnin_impl.1} parent=1 // pred_check
      _
    $region59: #{_burnin_impl.1} parent=1 // pred_check_branch
      %1603 = sbr.rel (0) target = $region61
    $region60: #{_burnin_impl.1} parent=1 // pred_region
      %1605 = vsyncadd [#allocation3], 0
      %s1606 = sshll.u32 [#allocation2], 4
      %s1607 = int_to_ptr.vmem [resolvable:$true] %s1606
      %s1608 = sshll.u32 %s14, 4
      %s1609 = int_to_ptr.hbm [resolvable:$true] %s1608
      %1614 = dma.vmem_to_hbm [thread:$0]  %s1607, 1536, %s1609, [#allocation3], 128, 128, 8
    $region61: #{_burnin_impl.1} parent=1 // pred_fallthru
      _
    // Predicated region
    $region62: #{_burnin_impl.1} parent=1 // pred_check
      _
    $region63: #{_burnin_impl.1} parent=1 // pred_check_branch
      %1616 = sbr.rel (0) target = $region65
    $region64: #{_burnin_impl.1} parent=1 // pred_region
      %1618 = vsyncadd [#allocation5], 0
      %s1619 = sshll.u32 [#allocation4], 4
      %s1620 = int_to_ptr.vmem [resolvable:$true] %s1619
      %s1621 = sshll.u32 %s15, 4
      %s1622 = int_to_ptr.hbm [resolvable:$true] %s1621
      %1627 = dma.vmem_to_hbm [thread:$0]  %s1620, 1536, %s1622, [#allocation5], 128, 128, 8
    $region65: #{_burnin_impl.1} parent=1 // pred_fallthru
      _
    // Predicated region
    $region66: #{_burnin_impl.1} parent=1 // pred_check
      _
    $region67: #{_burnin_impl.1} parent=1 // pred_check_branch
      %1629 = sbr.rel (0) target = $region69
    $region68: #{_burnin_impl.1} parent=1 // pred_region
      %1631 = vsyncadd [#allocation5], 0
      %s1632 = sshll.u32 [#allocation6], 4
      %s1633 = int_to_ptr.vmem [resolvable:$true] %s1632
      %s1634 = sshll.u32 %s16, 4
      %s1635 = int_to_ptr.hbm [resolvable:$true] %s1634
      %1640 = dma.vmem_to_hbm [thread:$0]  %s1633, 512, %s1635, [#allocation5], 128, 128, 8
    $region69: #{_burnin_impl.1} parent=1 // pred_fallthru
      _
    // Predicated region
    $region70: #{_burnin_impl.1} parent=1 // pred_check
      _
    $region71: #{_burnin_impl.1} parent=1 // pred_check_branch
      %1642 = sbr.rel (0) target = $region73
    $region72: #{_burnin_impl.1} parent=1 // pred_region
      %1644 = vsyncadd [#allocation8], 0
      %s1645 = sshll.u32 [#allocation7], 4
      %s1646 = int_to_ptr.vmem [resolvable:$true] %s1645
      %s1647 = sshll.u32 %s17, 4
      %s1648 = int_to_ptr.hbm [resolvable:$true] %s1647
      %1653 = dma.vmem_to_hbm [thread:$0]  %s1646, 512, %s1648, [#allocation8], 128, 128, 8
    $region73: #{_burnin_impl.1} parent=1 // pred_fallthru
      _
    // Predicated region
    $region74: #{_burnin_impl.1} parent=1 // pred_check
      _
    $region75: #{_burnin_impl.1} parent=1 // pred_check_branch
      %1655 = sbr.rel (0) target = $region77
    $region76: #{_burnin_impl.1} parent=1 // pred_region
      %1657 = vsyncadd [#allocation8], 0
      %s1658 = sshll.u32 [#allocation9], 4
      %s1659 = int_to_ptr.vmem [resolvable:$true] %s1658
      %s1660 = sshll.u32 %s18, 4
      %s1661 = int_to_ptr.hbm [resolvable:$true] %s1660
      %1666 = dma.vmem_to_hbm [thread:$0]  %s1659, 512, %s1661, [#allocation8], 128, 128, 8
    $region77: #{_burnin_impl.1} parent=1 // pred_fallthru
      _
    // Predicated region
    $region78: #{_burnin_impl.1} parent=1 // pred_check
      _
    $region79: #{_burnin_impl.1} parent=1 // pred_check_branch
      %1668 = sbr.rel (0) target = $region81
    $region80: #{_burnin_impl.1} parent=1 // pred_region
      %1670 = vsyncadd [#allocation11], 0
      %s1671 = sshll.u32 [#allocation10], 4
      %s1672 = int_to_ptr.vmem [resolvable:$true] %s1671
      %s1673 = sshll.u32 %s19, 4
      %s1674 = int_to_ptr.hbm [resolvable:$true] %s1673
      %1679 = dma.vmem_to_hbm [thread:$0]  %s1672, 512, %s1674, [#allocation11], 128, 128, 8
    $region81: #{_burnin_impl.1} parent=1 // pred_fallthru
      _
    // Predicated region
    $region82: #{_burnin_impl.1} parent=1 // pred_check
      _
    $region83: #{_burnin_impl.1} parent=1 // pred_check_branch
      %1681 = sbr.rel (0) target = $region85
    $region84: #{_burnin_impl.1} parent=1 // pred_region
      %1683 = vsyncadd [#allocation11], 0
      %s1684 = sshll.u32 [#allocation12], 4
      %s1685 = int_to_ptr.vmem [resolvable:$true] %s1684
      %s1686 = sshll.u32 %s20, 4
      %s1687 = int_to_ptr.hbm [resolvable:$true] %s1686
      %1692 = dma.vmem_to_hbm [thread:$0]  %s1685, 512, %s1687, [#allocation11], 128, 128, 8
    $region85: #{_burnin_impl.1} parent=1 // pred_fallthru
      _
    // Predicated region
    $region86: #{_burnin_impl.1} parent=1 // pred_check
      _
    $region87: #{_burnin_impl.1} parent=1 // pred_check_branch
      %1694 = sbr.rel (0) target = $region89
    $region88: #{_burnin_impl.1} parent=1 // pred_region
      %1696 = vsyncadd [#allocation14], 0
      %s1697 = sshll.u32 [#allocation13], 4
      %s1698 = int_to_ptr.vmem [resolvable:$true] %s1697
      %s1699 = sshll.u32 %s21, 4
      %s1700 = int_to_ptr.hbm [resolvable:$true] %s1699
      %1705 = dma.vmem_to_hbm [thread:$0]  %s1698, 512, %s1700, [#allocation14], 128, 128, 8
    $region89: #{_burnin_impl.1} parent=1 // pred_fallthru
      _
    // Predicated region
    $region90: #{_burnin_impl.1} parent=1 // pred_check
      _
    $region91: #{_burnin_impl.1} parent=1 // pred_check_branch
      %1707 = sbr.rel (0) target = $region93
    $region92: #{_burnin_impl.1} parent=1 // pred_region
      %1709 = vsyncadd [#allocation14], 0
      %s1710 = sshll.u32 [#allocation15], 4
      %s1711 = int_to_ptr.vmem [resolvable:$true] %s1710
      %s1712 = sshll.u32 %s22, 4
      %s1713 = int_to_ptr.hbm [resolvable:$true] %s1712
      %1718 = dma.vmem_to_hbm [thread:$0]  %s1711, 512, %s1713, [#allocation14], 128, 128, 8
    $region93: #{_burnin_impl.1} parent=1 // pred_fallthru
      _
    // Predicated region
    $region94: #{_burnin_impl.1} parent=1 // pred_check
      _
    $region95: #{_burnin_impl.1} parent=1 // pred_check_branch
      %1720 = sbr.rel (0) target = $region97
    $region96: #{_burnin_impl.1} parent=1 // pred_region
      %1722 = vsyncadd [#allocation17], 0
      %s1723 = sshll.u32 [#allocation16], 4
      %s1724 = int_to_ptr.vmem [resolvable:$true] %s1723
      %s1725 = sshll.u32 %s23, 4
      %s1726 = int_to_ptr.hbm [resolvable:$true] %s1725
      %1731 = dma.vmem_to_hbm [thread:$0]  %s1724, 512, %s1726, [#allocation17], 128, 128, 8
    $region97: #{_burnin_impl.1} parent=1 // pred_fallthru
      _
    // Predicated region
    $region98: #{_burnin_impl.1} parent=1 // pred_check
      _
    $region99: #{_burnin_impl.1} parent=1 // pred_check_branch
      %1733 = sbr.rel (0) target = $region101
    $region100: #{_burnin_impl.1} parent=1 // pred_region
      %1735 = dma.done [#allocation3], 1536
    $region101: #{_burnin_impl.1} parent=1 // pred_fallthru
      _
    // Predicated region
    $region102: #{_burnin_impl.1} parent=1 // pred_check
      _
    $region103: #{_burnin_impl.1} parent=1 // pred_check_branch
      %1737 = sbr.rel (0) target = $region105
    $region104: #{_burnin_impl.1} parent=1 // pred_region
      %1739 = dma.done [#allocation5], 1536
    $region105: #{_burnin_impl.1} parent=1 // pred_fallthru
      _
    // Predicated region
    $region106: #{_burnin_impl.1} parent=1 // pred_check
      _
    $region107: #{_burnin_impl.1} parent=1 // pred_check_branch
      %1741 = sbr.rel (0) target = $region109
    $region108: #{_burnin_impl.1} parent=1 // pred_region
      %1743 = dma.done [#allocation5], 512
    $region109: #{_burnin_impl.1} parent=1 // pred_fallthru
      _
    // Predicated region
    $region110: #{_burnin_impl.1} parent=1 // pred_check
      _
    $region111: #{_burnin_impl.1} parent=1 // pred_check_branch
      %1745 = sbr.rel (0) target = $region113
    $region112: #{_burnin_impl.1} parent=1 // pred_region
      %1747 = dma.done [#allocation8], 512
    $region113: #{_burnin_impl.1} parent=1 // pred_fallthru
      _
    // Predicated region
    $region114: #{_burnin_impl.1} parent=1 // pred_check
      _
    $region115: #{_burnin_impl.1} parent=1 // pred_check_branch
      %1749 = sbr.rel (0) target = $region117
    $region116: #{_burnin_impl.1} parent=1 // pred_region
      %1751 = dma.done [#allocation8], 512
    $region117: #{_burnin_impl.1} parent=1 // pred_fallthru
      _
    // Predicated region
    $region118: #{_burnin_impl.1} parent=1 // pred_check
      _
    $region119: #{_burnin_impl.1} parent=1 // pred_check_branch
      %1753 = sbr.rel (0) target = $region121
    $region120: #{_burnin_impl.1} parent=1 // pred_region
      %1755 = dma.done [#allocation11], 512
    $region121: #{_burnin_impl.1} parent=1 // pred_fallthru
      _
    // Predicated region
    $region122: #{_burnin_impl.1} parent=1 // pred_check
      _
    $region123: #{_burnin_impl.1} parent=1 // pred_check_branch
      %1757 = sbr.rel (0) target = $region125
    $region124: #{_burnin_impl.1} parent=1 // pred_region
      %1759 = dma.done [#allocation11], 512
    $region125: #{_burnin_impl.1} parent=1 // pred_fallthru
      _
    // Predicated region
    $region126: #{_burnin_impl.1} parent=1 // pred_check
      _
    $region127: #{_burnin_impl.1} parent=1 // pred_check_branch
      %1761 = sbr.rel (0) target = $region129
    $region128: #{_burnin_impl.1} parent=1 // pred_region
      %1763 = dma.done [#allocation14], 512
    $region129: #{_burnin_impl.1} parent=1 // pred_fallthru
      _
    // Predicated region
    $region130: #{_burnin_impl.1} parent=1 // pred_check
      _
    $region131: #{_burnin_impl.1} parent=1 // pred_check_branch
      %1765 = sbr.rel (0) target = $region133
    $region132: #{_burnin_impl.1} parent=1 // pred_region
      %1767 = dma.done [#allocation14], 512
    $region133: #{_burnin_impl.1} parent=1 // pred_fallthru
      _
    // Predicated region
    $region134: #{_burnin_impl.1} parent=1 // pred_check
      _
    $region135: #{_burnin_impl.1} parent=1 // pred_check_branch
      %1769 = sbr.rel (0) target = $region137
    $region136: #{_burnin_impl.1} parent=1 // pred_region
      %1771 = dma.done [#allocation17], 512
    $region137: #{_burnin_impl.1} parent=1 // pred_fallthru
      _
    %1772 = vsyncpa [#allocation3], 1
    %1773 = vsyncpa [#allocation5], 1
    %1774 = vsyncpa [#allocation8], 1
    %1775 = vsyncpa [#allocation11], 1
    %1776 = vsyncpa [#allocation14], 1
    %1777 = vsyncpa [#allocation17], 1

</llo_original>
